<compile_context>
chip_gen: v5e
topology: v5e:2x2
jax: 0.10.0
libtpu: 0.0.40
codegen_flags: <defaults>
</compile_context>

<pallas_src>
import functools

import jax
import jax.numpy as jnp
from jax.experimental import pallas as pl
from jax.experimental.pallas import tpu as pltpu

LRELU_SLOPE = 0.2
BN_EPS = 1e-5
KW = 4          # conv kernel size of the PyTorch module
PADW = 1        # conv padding of the PyTorch module
LANES = 128     # TPU lane width; CO is padded up to a multiple of this
M_TARGET = 2048   # target flat output positions (rows*WS) per grid step
M_SINGLE = 1024   # at or below this, one row block per image
VMEM_BUDGET = 24 * 2 ** 20  # per-step working-set budget used to pick TOH


def _round_up(x, m):
    return ((x + m - 1) // m) * m


def _vmem_cap():
    try:
        cap = int(pltpu.get_tpu_info().vmem_capacity_bytes)
        return int(min(96 * 2 ** 20, max(16 * 2 ** 20, cap // 2)))
    except Exception:  # conservative default (fits v7x's 64 MiB / TC)
        return 48 * 2 ** 20


# ----------------------------- Pallas kernels ------------------------------ #
def _stage_window(x0_ref, halo_ref, scale_ref, shift_ref, win_ref, *,
                  toh, kh, ws, fuse_in):
    """Stage the flat row window; optionally apply the previous layer's fused
    BatchNorm affine + LeakyReLU to the freshly loaded activation."""
    cs = x0_ref.shape[-1]
    mwin = (toh + kh - 1) * ws

    def tr(v):
        if not fuse_in:
            return v
        z = v.astype(jnp.float32) * scale_ref[...] + shift_ref[...]
        z = jnp.where(z >= 0, z, LRELU_SLOPE * z)
        return z.astype(jnp.bfloat16)

    win_ref[0:toh * ws, :] = tr(x0_ref[0])
    win_ref[toh * ws:mwin, :] = tr(halo_ref[0, 0])
    # Zero the slack rows so the wrap-around taps stay finite (stats masking).
    win_ref[mwin:, :] = jnp.zeros((win_ref.shape[0] - mwin, cs), jnp.bfloat16)


def _conv_accum(w_ref, win_ref, *, kh, kw, toh, ws):
    """All kh*kw taps fused into one MXU matmul with K = kh*kw*CS."""
    m = toh * ws
    taps = [win_ref[i * ws + j:i * ws + j + m, :]
            for i in range(kh) for j in range(kw)]
    patch = jnp.concatenate(taps, axis=-1)                 # [M, kh*kw*CS] bf16
    return jnp.dot(patch, w_ref[...], preferred_element_type=jnp.float32)


def _conv_bias_kernel(x0_ref, halo_ref, w_ref, scale_ref, shift_ref, b_ref,
                      o_ref, win_ref, *, kh, kw, toh, ws, fuse_in, leaky):
    """(fused input affine+leaky) -> conv -> + bias -> (leaky) -> bf16 store."""
    _stage_window(x0_ref, halo_ref, scale_ref, shift_ref, win_ref,
                  toh=toh, kh=kh, ws=ws, fuse_in=fuse_in)
    y = _conv_accum(w_ref, win_ref, kh=kh, kw=kw, toh=toh, ws=ws) + b_ref[...]
    if leaky:
        y = jnp.where(y >= 0, y, LRELU_SLOPE * y)
    o_ref[...] = y.astype(o_ref.dtype).reshape(o_ref.shape)


def _conv_stats_kernel(x0_ref, halo_ref, w_ref, scale_ref, shift_ref,
                       o_ref, stats_ref, win_ref, *,
                       kh, kw, toh, ws, ow, oh, fuse_in):
    """(fused input affine+leaky) -> raw conv (bf16) + masked shifted stats."""
    _stage_window(x0_ref, halo_ref, scale_ref, shift_ref, win_ref,
                  toh=toh, kh=kh, ws=ws, fuse_in=fuse_in)
    acc = _conv_accum(w_ref, win_ref, kh=kh, kw=kw, toh=toh, ws=ws)
    o_ref[...] = acc.astype(o_ref.dtype).reshape(o_ref.shape)

    # Mask tiling-pad rows and the kw-1 wrap columns of the flat WS layout.
    m = toh * ws
    pos = jax.lax.broadcasted_iota(jnp.int32, (m, 1), 0)
    r0 = pl.program_id(1) * toh
    valid = ((r0 + pos // ws) < oh) & ((pos % ws) < ow)
    mf = valid.astype(jnp.float32)
    cnt = jnp.maximum(jnp.sum(mf), 1.0)
    s1 = jnp.sum(acc * mf, axis=0, keepdims=True)          # masked sum
    mu = s1 / cnt                                           # per-tile shift
    d = (acc - mu) * mf
    s2 = jnp.sum(d * d, axis=0, keepdims=True)              # shifted sumsq
    stats_ref[0, 0, 0:1, :] = s1
    stats_ref[0, 0, 1:2, :] = s2
    stats_ref[0, 0, 2:3, :] = mu


# ------------------------------- glue (JAX) -------------------------------- #
def _prepare_layer(x, w_hwio, stride, in_scale, in_shift):
    """Lower a 4x4/stride-{1,2}/pad-1 conv into the flat stride-1 tap form.

    Returns (x_main, halo, w_flat, scale_cs, shift_cs, geom):
      x_main : [N, RB*TOH*WS, CS] bf16  flattened (row, col) activation
      halo   : [N, RB, (kh-1)*WS, CS] bf16
      w_flat : [kh*kw*CS, CO_pad] bf16
    """
    N, H, W, CI = x.shape
    CO = w_hwio.shape[3]
    OH = (H + 2 * PADW - KW) // stride + 1
    OW = (W + 2 * PADW - KW) // stride + 1
    if stride == 2:
        kh = kw = 2           # 4x4 s2 conv == 2x2 s1 conv on 2x2 space-to-depth
        CS = 4 * CI
    else:
        kh = kw = KW
        CS = CI
    CO_pad = _round_up(CO, LANES)
    WS = OW + kw - 1

    # Row tiling: biggest TOH (multiple of 8) within the VMEM budget.
    if OH * WS <= M_SINGLE:
        TOH, RB = OH, 1
    else:
        per_row = WS * (8 * CS + 2 * kh * kw * CS + 12 * CO_pad)
        toh = min(max(1, M_TARGET // WS), max(1, VMEM_BUDGET // max(per_row, 1)))
        toh = max(8, (toh // 8) * 8)
        if toh >= OH:
            TOH, RB = OH, 1
        else:
            TOH, RB = toh, pl.cdiv(OH, toh)

    rows_needed = RB * TOH + kh - 1

    # Fused previous-layer BN: scale/shift vectors and per-channel pad value.
    if in_scale is None:
        pv = None
        sc = jnp.ones((1, CS), jnp.float32)
        sh = jnp.zeros((1, CS), jnp.float32)
    else:
        scf = in_scale.astype(jnp.float32)
        shf = in_shift.astype(jnp.float32)
        safe = jnp.where(jnp.abs(scf) < 1e-12, jnp.float32(1e-12), scf)
        pv = -shf / safe          # pad value so leaky(scale*pv + shift) == 0
        rep = 4 if stride == 2 else 1
        sc = jnp.tile(scf, rep).reshape(1, CS)
        sh = jnp.tile(shf, rep).reshape(1, CS)

    if stride == 2:
        HP, WP = 2 * rows_needed, 2 * WS
    else:
        HP, WP = rows_needed, WS
    pads = ((0, 0), (PADW, HP - H - PADW), (PADW, WP - W - PADW), (0, 0))
    if pv is None:
        xp = jnp.pad(x.astype(jnp.bfloat16), pads)
    else:
        xp = (jnp.pad(x.astype(jnp.float32) - pv, pads) + pv).astype(jnp.bfloat16)

    if stride == 2:
        xs = xp.reshape(N, rows_needed, 2, WS, 2, CI)
        xs = xs.transpose(0, 1, 3, 2, 4, 5).reshape(N, rows_needed, WS, CS)
        wg = w_hwio.reshape(2, 2, 2, 2, CI, CO).transpose(0, 2, 1, 3, 4, 5)
        wg = wg.reshape(kh, kw, CS, CO)
    else:
        xs = xp
        wg = w_hwio

    x_main = xs[:, :RB * TOH].reshape(N, RB * TOH * WS, CS)
    hrows = ((jnp.arange(RB) + 1) * TOH)[:, None] + jnp.arange(kh - 1)[None, :]
    halo = jnp.take(xs, hrows.reshape(-1), axis=1)
    halo = halo.reshape(N, RB, (kh - 1) * WS, CS)

    w_flat = jnp.pad(wg, ((0, 0), (0, 0), (0, 0), (0, CO_pad - CO)))
    w_flat = w_flat.reshape(kh * kw * CS, CO_pad).astype(jnp.bfloat16)

    g = dict(N=N, OH=OH, OW=OW, CS=CS, CO=CO, CO_pad=CO_pad, kh=kh, kw=kw,
             TOH=TOH, RB=RB, WS=WS, M=TOH * WS, K=kh * kw * CS,
             HWIN=(kh - 1) * WS)
    return x_main, halo, w_flat, sc, sh, g


def _specs(g):
    x_spec = pl.BlockSpec((1, g["M"], g["CS"]), lambda n, r: (n, r, 0))
    h_spec = pl.BlockSpec((1, 1, g["HWIN"], g["CS"]), lambda n, r: (n, r, 0, 0))
    w_spec = pl.BlockSpec((g["K"], g["CO_pad"]), lambda n, r: (0, 0))
    s_spec = pl.BlockSpec((1, g["CS"]), lambda n, r: (0, 0))
    o_spec = pl.BlockSpec((1, 1, g["M"], g["CO_pad"]), lambda n, r: (n, r, 0, 0))
    return x_spec, h_spec, w_spec, s_spec, o_spec


def _win_scratch(g):
    return pltpu.VMEM(((g["TOH"] + g["kh"]) * g["WS"], g["CS"]), jnp.bfloat16)


def _vmem_limit(g):
    est = (2 * g["M"] * g["CS"] * 2            # x0 double buffer (bf16)
           + 2 * g["HWIN"] * g["CS"] * 2       # halo double buffer
           + 2 * g["K"] * g["CO_pad"] * 2      # weights (resident)
           + (g["M"] + g["kh"] * g["WS"]) * g["CS"] * 2   # window scratch
           + g["M"] * g["K"] * 2               # fused patch
           + g["M"] * g["CO_pad"] * 4          # f32 accumulator
           + 2 * g["M"] * g["CO_pad"] * 2)     # bf16 output double buffer
    return int(min(_vmem_cap(), max(16 * 2 ** 20, 2 * est + (1 << 20))))


def _cost(g):
    steps = g["N"] * g["RB"]
    flops = 2 * steps * g["M"] * g["K"] * g["CO_pad"]
    bytes_accessed = (steps * (g["M"] + g["HWIN"]) * g["CS"] * 2
                      + g["K"] * g["CO_pad"] * 2
                      + steps * g["M"] * g["CO_pad"] * 2)
    return pl.CostEstimate(flops=flops, transcendentals=0,
                           bytes_accessed=bytes_accessed)


def _conv_bias_layer(x, layer, in_scale, in_shift):
    x_main, halo, w_flat, sc, sh, g = _prepare_layer(
        x, layer["w_hwio"], layer["stride"], in_scale, in_shift)
    b = jnp.pad(layer["b"], (0, g["CO_pad"] - g["CO"]))
    b = b.reshape(1, g["CO_pad"]).astype(jnp.float32)
    x_spec, h_spec, w_spec, s_spec, o_spec = _specs(g)
    b_spec = pl.BlockSpec((1, g["CO_pad"]), lambda n, r: (0, 0))
    kernel = functools.partial(
        _conv_bias_kernel, kh=g["kh"], kw=g["kw"], toh=g["TOH"], ws=g["WS"],
        fuse_in=in_scale is not None, leaky=layer["leaky"])
    y = pl.pallas_call(
        kernel,
        grid=(g["N"], g["RB"]),
        in_specs=[x_spec, h_spec, w_spec, s_spec, s_spec, b_spec],
        out_specs=o_spec,
        out_shape=jax.ShapeDtypeStruct(
            (g["N"], g["RB"], g["M"], g["CO_pad"]), jnp.bfloat16),
        scratch_shapes=[_win_scratch(g)],
        compiler_params=pltpu.CompilerParams(
            dimension_semantics=("parallel", "parallel"),
            vmem_limit_bytes=_vmem_limit(g)),
        cost_estimate=_cost(g),
    )(x_main, halo, w_flat, sc, sh, b)
    y = y.reshape(g["N"], g["RB"] * g["TOH"], g["WS"], g["CO_pad"])
    return y[:, :g["OH"], :g["OW"], :g["CO"]]


def _conv_bn_layer(x, layer, in_scale, in_shift):
    """Conv + exact batch stats; returns raw conv output and the (scale, shift)
    of its BatchNorm, which the NEXT layer's kernel applies (fused)."""
    x_main, halo, w_flat, sc, sh, g = _prepare_layer(
        x, layer["w_hwio"], layer["stride"], in_scale, in_shift)
    x_spec, h_spec, w_spec, s_spec, o_spec = _specs(g)
    st_spec = pl.BlockSpec((1, 1, 3, g["CO_pad"]), lambda n, r: (n, r, 0, 0))
    kernel = functools.partial(
        _conv_stats_kernel, kh=g["kh"], kw=g["kw"], toh=g["TOH"], ws=g["WS"],
        ow=g["OW"], oh=g["OH"], fuse_in=in_scale is not None)
    y, stats = pl.pallas_call(
        kernel,
        grid=(g["N"], g["RB"]),
        in_specs=[x_spec, h_spec, w_spec, s_spec, s_spec],
        out_specs=(o_spec, st_spec),
        out_shape=(
            jax.ShapeDtypeStruct((g["N"], g["RB"], g["M"], g["CO_pad"]),
                                 jnp.bfloat16),
            jax.ShapeDtypeStruct((g["N"], g["RB"], 3, g["CO_pad"]),
                                 jnp.float32),
        ),
        scratch_shapes=[_win_scratch(g)],
        compiler_params=pltpu.CompilerParams(
            dimension_semantics=("parallel", "parallel"),
            vmem_limit_bytes=_vmem_limit(g)),
        cost_estimate=_cost(g),
    )(x_main, halo, w_flat, sc, sh)

    # Exact, cancellation-free merge of per-tile shifted sums (tiny XLA work).
    co = g["CO"]
    s1 = stats[:, :, 0, :co]
    s2 = stats[:, :, 1, :co]
    mu = stats[:, :, 2, :co]
    n_rows = jnp.clip(g["OH"] - jnp.arange(g["RB"]) * g["TOH"], 0, g["TOH"])
    n_t = (n_rows * g["OW"]).astype(jnp.float32).reshape(1, g["RB"], 1)
    count = float(g["N"] * g["OH"] * g["OW"])
    mean = jnp.sum(s1, axis=(0, 1)) / count
    delta = mu - mean
    contrib = s2 + 2.0 * delta * (s1 - n_t * mu) + n_t * delta * delta
    var = jnp.maximum(jnp.sum(contrib, axis=(0, 1)) / count, 0.0)
    inv = jax.lax.rsqrt(var + BN_EPS)
    scale = layer["gamma"] * inv
    shift = layer["beta"] - mean * scale

    y = y.reshape(g["N"], g["RB"] * g["TOH"], g["WS"], g["CO_pad"])
    return y[:, :g["OH"], :g["OW"], :g["CO"]], scale, shift


# ------------------------------- parameters -------------------------------- #
def init_params(key, image_channel=3, ndf=8, n_layers=3):
    """Deterministic synthetic init mirroring the PyTorch module structure.

    norm_layer == nn.BatchNorm2d  ->  use_bias = False for inner convs.
    """
    params = []
    keys = jax.random.split(key, 4 * (n_layers + 2))
    ki = 0

    def conv_w(k, ci, co):
        return 0.02 * jax.random.normal(k, (KW, KW, ci, co), jnp.float32)  # HWIO

    # layer 0: Conv(image_channel -> ndf, stride 2, bias=True) + LeakyReLU
    w = conv_w(keys[ki], image_channel, ndf); ki += 1
    b = 0.02 * jax.random.normal(keys[ki], (ndf,), jnp.float32); ki += 1
    params.append(dict(kind="conv_bias", w_hwio=w, b=b, stride=2, leaky=True))

    nf_mult = 1
    for n in range(1, n_layers):
        nf_mult_prev, nf_mult = nf_mult, min(2 ** n, 8)
        ci, co = ndf * nf_mult_prev, ndf * nf_mult
        w = conv_w(keys[ki], ci, co); ki += 1
        g = 1.0 + 0.1 * jax.random.normal(keys[ki], (co,), jnp.float32); ki += 1
        bt = 0.1 * jax.random.normal(keys[ki], (co,), jnp.float32); ki += 1
        params.append(dict(kind="conv_bn", w_hwio=w, gamma=g, beta=bt, stride=2))

    nf_mult_prev, nf_mult = nf_mult, min(2 ** n_layers, 8)
    ci, co = ndf * nf_mult_prev, ndf * nf_mult
    w = conv_w(keys[ki], ci, co); ki += 1
    g = 1.0 + 0.1 * jax.random.normal(keys[ki], (co,), jnp.float32); ki += 1
    bt = 0.1 * jax.random.normal(keys[ki], (co,), jnp.float32); ki += 1
    params.append(dict(kind="conv_bn", w_hwio=w, gamma=g, beta=bt, stride=1))

    # final: Conv(ndf*nf_mult -> 1, stride 1, bias=True), no activation
    w = conv_w(keys[ki], co, 1); ki += 1
    b = 0.02 * jax.random.normal(keys[ki], (1,), jnp.float32); ki += 1
    params.append(dict(kind="conv_bias", w_hwio=w, b=b, stride=1, leaky=False))
    return params


# ------------------------------- forward pass ------------------------------ #
def discriminator_forward(x_nchw, params):
    """Pallas forward. Input/output are NCHW to match PyTorch."""
    x = jnp.transpose(x_nchw, (0, 2, 3, 1))                       # -> NHWC
    scale = shift = None
    for layer in params:
        if layer["kind"] == "conv_bias":
            x = _conv_bias_layer(x, layer, scale, shift)
            scale = shift = None
        else:
            x, scale, shift = _conv_bn_layer(x, layer, scale, shift)
    if scale is not None:  # only if the module ended on a BN layer (it doesn't)
        z = x.astype(jnp.float32) * scale + shift
        x = jnp.where(z >= 0, z, LRELU_SLOPE * z)
    return jnp.transpose(x, (0, 3, 1, 2)).astype(jnp.float32)     # -> NCHW


def reference_forward(x_nchw, params):
    """Pure-JAX f32 reference (lax.conv) for correctness checking."""
    x = jnp.transpose(x_nchw, (0, 2, 3, 1)).astype(jnp.float32)
    for layer in params:
        y = jax.lax.conv_general_dilated(
            x, layer["w_hwio"], (layer["stride"],) * 2,
            ((PADW, PADW), (PADW, PADW)),
            dimension_numbers=("NHWC", "HWIO", "NHWC"),
            precision=jax.lax.Precision.HIGHEST)
        if layer["kind"] == "conv_bias":
            y = y + layer["b"]
            if layer["leaky"]:
                y = jnp.where(y >= 0, y, LRELU_SLOPE * y)
        else:
            mean = jnp.mean(y, axis=(0, 1, 2), keepdims=True)
            var = jnp.mean(jnp.square(y - mean), axis=(0, 1, 2), keepdims=True)
            y = (y - mean) * jax.lax.rsqrt(var + BN_EPS)
            y = y * layer["gamma"] + layer["beta"]
            y = jnp.where(y >= 0, y, LRELU_SLOPE * y)
        x = y
    return jnp.transpose(x, (0, 3, 1, 2))


if __name__ == "__main__":
    key = jax.random.PRNGKey(0)
    k_x, k_p = jax.random.split(key)

    N, C, H, W = 2, 3, 32, 32            # spatial=32 so all 5 convs fit
    ndf, n_layers = 8, 3

    x = jax.random.normal(k_x, (N, C, H, W), jnp.float32)
    params = init_params(k_p, image_channel=C, ndf=ndf, n_layers=n_layers)

    out = jax.block_until_ready(discriminator_forward(x, params))
    ref = jax.block_until_ready(reference_forward(x, params))

    assert out.shape == ref.shape == (N, 1, 2, 2), out.shape
    err = float(jnp.max(jnp.abs(out - ref)))
    # bf16 MXU operands and bf16-stored intermediates vs. an f32-HIGHEST
    # reference -> loosened tolerance.
    assert jnp.allclose(out, ref, rtol=6e-2, atol=6e-2), err
    print("KERNEL_OK")
</pallas_src>

<mosaic_0001>
module attributes {stable_mosaic.version = 11 : i64} {
  func.func @_conv_bias_kernel(%arg0: i32, %arg1: i32, %arg2: memref<1x272x12xbf16, #tpu.memory_space<vmem>>, %arg3: memref<1x1x17x12xbf16, #tpu.memory_space<vmem>>, %arg4: memref<48x128xbf16, #tpu.memory_space<vmem>>, %arg5: memref<1x12xf32, #tpu.memory_space<vmem>>, %arg6: memref<1x12xf32, #tpu.memory_space<vmem>>, %arg7: memref<1x128xf32, #tpu.memory_space<vmem>>, %arg8: memref<1x1x272x128xbf16, #tpu.memory_space<vmem>>, %arg9: memref<306x12xbf16, #tpu.memory_space<vmem>>) attributes {dimension_semantics = [#tpu.dimension_semantics<parallel>, #tpu.dimension_semantics<parallel>], iteration_bounds = array<i64: 2, 1>, scalar_prefetch = 0 : i64, scratch_operands = 1 : i64, tpu.core_type = #tpu.core_type<tc>, window_params = [{transform_indices = @transform_0, window_bounds = array<i64: 1, 272, 12>}, {transform_indices = @transform_1, window_bounds = array<i64: 1, 1, 17, 12>}, {pipeline_mode = #tpu.pipeline_mode<synchronous>, transform_indices = @transform_2, window_bounds = array<i64: 48, 128>}, {pipeline_mode = #tpu.pipeline_mode<synchronous>, transform_indices = @transform_3, window_bounds = array<i64: 1, 12>}, {pipeline_mode = #tpu.pipeline_mode<synchronous>, transform_indices = @transform_4, window_bounds = array<i64: 1, 12>}, {pipeline_mode = #tpu.pipeline_mode<synchronous>, transform_indices = @transform_5, window_bounds = array<i64: 1, 128>}, {transform_indices = @transform_6, window_bounds = array<i64: 1, 1, 272, 128>}]} {
    %c0 = arith.constant 0 : index
    %c0_0 = arith.constant 0 : index
    %c0_1 = arith.constant 0 : index
    %0 = vector.load %arg2[%c0, %c0_0, %c0_1] : memref<1x272x12xbf16, #tpu.memory_space<vmem>>, vector<1x272x12xbf16>
    %1 = vector.shape_cast %0 : vector<1x272x12xbf16> to vector<272x12xbf16>
    %c0_2 = arith.constant 0 : index
    %c0_3 = arith.constant 0 : index
    %2 = vector.load %arg9[%c0_2, %c0_3] : memref<306x12xbf16, #tpu.memory_space<vmem>>, vector<272x12xbf16>
    tpu.vector_store %arg9[%c0_2, %c0_3], %1 {strides = array<i32>} : memref<306x12xbf16, #tpu.memory_space<vmem>>, vector<272x12xbf16>,
    %c0_4 = arith.constant 0 : index
    %c0_5 = arith.constant 0 : index
    %c0_6 = arith.constant 0 : index
    %c0_7 = arith.constant 0 : index
    %3 = vector.load %arg3[%c0_4, %c0_5, %c0_6, %c0_7] : memref<1x1x17x12xbf16, #tpu.memory_space<vmem>>, vector<1x1x17x12xbf16>
    %4 = vector.shape_cast %3 : vector<1x1x17x12xbf16> to vector<17x12xbf16>
    %c272 = arith.constant 272 : index
    %c0_8 = arith.constant 0 : index
    %5 = vector.load %arg9[%c272, %c0_8] : memref<306x12xbf16, #tpu.memory_space<vmem>>, vector<17x12xbf16>
    tpu.vector_store %arg9[%c272, %c0_8], %4 {strides = array<i32>} : memref<306x12xbf16, #tpu.memory_space<vmem>>, vector<17x12xbf16>,
    %cst = arith.constant 0.000000e+00 : bf16
    %6 = vector.broadcast %cst : bf16 to vector<17x12xbf16>
    %c289 = arith.constant 289 : index
    %c0_9 = arith.constant 0 : index
    %7 = vector.load %arg9[%c289, %c0_9] : memref<306x12xbf16, #tpu.memory_space<vmem>>, vector<17x12xbf16>
    tpu.vector_store %arg9[%c289, %c0_9], %6 {strides = array<i32>} : memref<306x12xbf16, #tpu.memory_space<vmem>>, vector<17x12xbf16>,
    %c0_10 = arith.constant 0 : index
    %c0_11 = arith.constant 0 : index
    %8 = vector.load %arg9[%c0_10, %c0_11] : memref<306x12xbf16, #tpu.memory_space<vmem>>, vector<272x12xbf16>
    %c1 = arith.constant 1 : index
    %c0_12 = arith.constant 0 : index
    %9 = vector.load %arg9[%c1, %c0_12] : memref<306x12xbf16, #tpu.memory_space<vmem>>, vector<272x12xbf16>
    %c17 = arith.constant 17 : index
    %c0_13 = arith.constant 0 : index
    %10 = vector.load %arg9[%c17, %c0_13] : memref<306x12xbf16, #tpu.memory_space<vmem>>, vector<272x12xbf16>
    %c18 = arith.constant 18 : index
    %c0_14 = arith.constant 0 : index
    %11 = vector.load %arg9[%c18, %c0_14] : memref<306x12xbf16, #tpu.memory_space<vmem>>, vector<272x12xbf16>
    %12 = tpu.concatenate %8, %9, %10, %11 in 1 : vector<272x12xbf16>, vector<272x12xbf16>, vector<272x12xbf16>, vector<272x12xbf16> -> vector<272x48xbf16>
    %c0_15 = arith.constant 0 : index
    %c0_16 = arith.constant 0 : index
    %13 = vector.load %arg4[%c0_15, %c0_16] : memref<48x128xbf16, #tpu.memory_space<vmem>>, vector<48x128xbf16>
    %cst_17 = arith.constant dense<0.000000e+00> : vector<272x128xf32>
    %14 = tpu.matmul %12, %13, %cst_17 {dimension_numbers = #tpu.dot_dimension_numbers<[1], [0], [0], [1], [0, 0, 1, 1], [], []>} : vector<272x48xbf16>, vector<48x128xbf16>, vector<272x128xf32> -> vector<272x128xf32>
    %c0_18 = arith.constant 0 : index
    %c0_19 = arith.constant 0 : index
    %15 = vector.load %arg7[%c0_18, %c0_19] : memref<1x128xf32, #tpu.memory_space<vmem>>, vector<1x128xf32>
    %16 = vector.broadcast %15 : vector<1x128xf32> to vector<272x128xf32>
    %17 = arith.addf %14, %16 : vector<272x128xf32>
    %cst_20 = arith.constant 0.000000e+00 : f32
    %18 = vector.broadcast %cst_20 : f32 to vector<272x128xf32>
    %19 = arith.cmpf oge, %17, %18 : vector<272x128xf32>
    %cst_21 = arith.constant 2.000000e-01 : f32
    %20 = vector.broadcast %cst_21 : f32 to vector<272x128xf32>
    %21 = arith.mulf %20, %17 : vector<272x128xf32>
    %22 = arith.select %19, %17, %21 : vector<272x128xi1>, vector<272x128xf32>
    %23 = arith.truncf %22 : vector<272x128xf32> to vector<272x128xbf16>
    %24 = vector.shape_cast %23 : vector<272x128xbf16> to vector<1x1x272x128xbf16>
    %c0_22 = arith.constant 0 : index
    %c0_23 = arith.constant 0 : index
    %c0_24 = arith.constant 0 : index
    %c0_25 = arith.constant 0 : index
    %25 = vector.load %arg8[%c0_22, %c0_23, %c0_24, %c0_25] : memref<1x1x272x128xbf16, #tpu.memory_space<vmem>>, vector<1x1x272x128xbf16>
    tpu.vector_store %arg8[%c0_22, %c0_23, %c0_24, %c0_25], %24 {strides = array<i32>} : memref<1x1x272x128xbf16, #tpu.memory_space<vmem>>, vector<1x1x272x128xbf16>,
    return
  }
  func.func @transform_0(%arg0: i32, %arg1: i32) -> (i32, i32, i32) {
    %c0_i32 = arith.constant 0 : i32
    %c0_i32_0 = arith.constant 0 : i32
    return %arg0, %arg1, %c0_i32 : i32, i32, i32
  }
  func.func @transform_1(%arg0: i32, %arg1: i32) -> (i32, i32, i32, i32) {
    %c0_i32 = arith.constant 0 : i32
    %c0_i32_0 = arith.constant 0 : i32
    %c0_i32_1 = arith.constant 0 : i32
    return %arg0, %arg1, %c0_i32, %c0_i32_0 : i32, i32, i32, i32
  }
  func.func @transform_2(%arg0: i32, %arg1: i32) -> (i32, i32) {
    %c0_i32 = arith.constant 0 : i32
    %c0_i32_0 = arith.constant 0 : i32
    %c0_i32_1 = arith.constant 0 : i32
    return %c0_i32, %c0_i32_0 : i32, i32
  }
  func.func @transform_3(%arg0: i32, %arg1: i32) -> (i32, i32) {
    %c0_i32 = arith.constant 0 : i32
    %c0_i32_0 = arith.constant 0 : i32
    %c0_i32_1 = arith.constant 0 : i32
    return %c0_i32, %c0_i32_0 : i32, i32
  }
  func.func @transform_4(%arg0: i32, %arg1: i32) -> (i32, i32) {
    %c0_i32 = arith.constant 0 : i32
    %c0_i32_0 = arith.constant 0 : i32
    %c0_i32_1 = arith.constant 0 : i32
    return %c0_i32, %c0_i32_0 : i32, i32
  }
  func.func @transform_5(%arg0: i32, %arg1: i32) -> (i32, i32) {
    %c0_i32 = arith.constant 0 : i32
    %c0_i32_0 = arith.constant 0 : i32
    %c0_i32_1 = arith.constant 0 : i32
    return %c0_i32, %c0_i32_0 : i32, i32
  }
  func.func @transform_6(%arg0: i32, %arg1: i32) -> (i32, i32, i32, i32) {
    %c0_i32 = arith.constant 0 : i32
    %c0_i32_0 = arith.constant 0 : i32
    %c0_i32_1 = arith.constant 0 : i32
    return %arg0, %arg1, %c0_i32, %c0_i32_0 : i32, i32, i32, i32
  }
}

</mosaic_0001>

<llo_original>
// kernel: tpu_custom_call.1
$region0: #{tpu_custom_call.1}
  #allocation0 [shape = 'u32[]', space=smem, size = 0x4, offset = 0x4, fixed_abs, tag = 'smem constant byte address 0x4 - core index']
  #allocation1 [shape = 'u32[72,128]{1,0:T(1,128)}', space=vmem, size = 0x9000, scoped, tag = 'internal scratch']
  #allocation2 [shape = 'bf16[306,12]{1,0:T(8,128)(2,1)}', space=vmem, size = 0x13800, scoped, tag = 'scratch operand']
  %s0 = inlined_call_operand.vmem [shape: bf16[2,272,12], index: 0, kind: input, shape index: {}]
  %s1 = inlined_call_operand.vmem [shape: bf16[2,1,17,12], index: 1, kind: input, shape index: {}]
  %s2 = inlined_call_operand.vmem [shape: bf16[48,128], index: 2, kind: input, shape index: {}]
  %s3 = inlined_call_operand.vmem [shape: f32[1,12], index: 3, kind: input, shape index: {}]
  %s4 = inlined_call_operand.vmem [shape: f32[1,12], index: 4, kind: input, shape index: {}]
  %s5 = inlined_call_operand.vmem [shape: f32[1,128], index: 5, kind: input, shape index: {}]
  %s6 = inlined_call_operand.hbm [shape: bf16[2,1,272,128], index: 6, kind: output, shape index: {}]
  %s7 = sld [smem:[#allocation0]]
  $region57: #{tpu_custom_call.1} parent=0
    _
  %s9 = ssub.s32 1, %s7
  %s10 = scalar_select 0, %s9, %s7
  $region1: #{tpu_custom_call.1} parent=0
    #allocation3 [shape = 'u8[139264]{0}', space=vmem, size = 0x22000, scoped, tag = 'output window, operand 0']
    #allocation4 [shape = 's32[2]{0}', space=sflag, size = 0x8, scoped, tag = 'scoped memory for tpu_custom_call.1']
    %11 = vsyncpa [#allocation4], 0
    %s12 = scalar_lea.sflag [#allocation4], 1
    %13 = vsyncpa %s12, 0
    loop: start=0, step=1, limit=4
    $region2: #{tpu_custom_call.1} parent=1 // loop_pre_header
      _
    $region3: #{tpu_custom_call.1} parent=1 // loop_header
      %s15 = sphi 0, %s19
      %p16 = scmp.ge.s32.totalorder %s15, 4
      %s22 = sphi 0, %s34
      %s23 = sphi 0, %s30
      %s24 = sphi 0, %s22
      %s25 = sphi 0, %s23
      %s26 = sphi 0, %s24
      %s27 = sphi 0, %s25
      %s39 = sphi 0, %s41
      %s42 = sphi 0, %s39
      %s43 = sphi 0, %s42
      %s59 = sphi 0, %s43
      %s67 = sphi 0, %s69
      %s70 = sphi 0, %s67
      %s71 = sphi 0, %s70
      %s87 = sphi 0, %s71
      %s91 = sphi 0, %s91
      %s93 = sphi 0, %s91
      %s94 = sphi 0, %s93
      %s108 = sphi 0, %s94
      %s112 = sphi 0, %s112
      %s114 = sphi 0, %s112
      %s115 = sphi 0, %s114
      %s129 = sphi 0, %s115
      %s133 = sphi 0, %s133
      %s135 = sphi 0, %s133
      %s136 = sphi 0, %s135
      %s150 = sphi 0, %s136
      %s154 = sphi 0, %s154
      %s156 = sphi 0, %s154
      %s157 = sphi 0, %s156
      %s171 = sphi 0, %s157
      %s179 = sphi 0, %s181
      %s182 = sphi 0, %s179
      %s183 = sphi 0, %s182
      %s199 = sphi 0, %s183
    $region4: #{tpu_custom_call.1} parent=1 // loop_header_branch
      %18 = sbr.rel (%p16) target = $region8
    $region5: #{tpu_custom_call.1} parent=1 // loop_body
      %s20 = ssub.s32 %s15, 1
      %s21 = ssub.s32 %s15, 2
      %s28 = sadd.s32 1, %s23
      %p29 = scmp.ge.s32.totalorder %s28, 1
      %s30 = scalar_select %p29, 0, %s28
      %s31 = sadd.s32 1, %s22
      %s32 = scalar_select %p29, %s31, %s22
      %p33 = scmp.ge.s32.totalorder %s32, 2
      %s34 = scalar_select %p33, 0, %s32
      %s35 = ssub.s32 %s22, %s34
      %s36 = ssub.s32 %s23, %s30
      %s37 = sor.u32 %s35, %s36
      %p38 = scmp.eq.s32.totalorder %s37, 0
      %s40 = sadd.s32 %s39, 1
      %s41 = scalar_select %p38, %s39, %s40
      %p44 = pneg %p38
      %p45 = scmp.eq.s32.totalorder %s15, 1
      %p46 = por %p44, %p45
      %p47 = scmp.ne.s32.totalorder %s39, %s42
      %p48 = scmp.eq.s32.totalorder %s15, 0
      %p49 = por %p47, %p48
      %p50 = scmp.ne.s32.totalorder %s39, %s42
      %p51 = scmp.eq.s32.totalorder %s20, 1
      %p52 = por %p50, %p51
      %p53 = scmp.ne.s32.totalorder %s42, %s43
      %p54 = scmp.eq.s32.totalorder %s20, 0
      %p55 = por %p53, %p54
      %p56 = scmp.ne.s32.totalorder %s42, %s43
      %p57 = scmp.eq.s32.totalorder %s21, 1
      %p58 = por %p56, %p57
      %p60 = scmp.ne.s32.totalorder %s43, %s59
      %p61 = scmp.eq.s32.totalorder %s21, 0
      %p62 = por %p60, %p61
      %s63 = ssub.s32 %s22, %s34
      %s64 = ssub.s32 %s23, %s30
      %s65 = sor.u32 %s63, %s64
      %p66 = scmp.eq.s32.totalorder %s65, 0
      %s68 = sadd.s32 %s67, 1
      %s69 = scalar_select %p66, %s67, %s68
      %p72 = pneg %p66
      %p73 = scmp.eq.s32.totalorder %s15, 1
      %p74 = por %p72, %p73
      %p75 = scmp.ne.s32.totalorder %s67, %s70
      %p76 = scmp.eq.s32.totalorder %s15, 0
      %p77 = por %p75, %p76
      %p78 = scmp.ne.s32.totalorder %s67, %s70
      %p79 = scmp.eq.s32.totalorder %s20, 1
      %p80 = por %p78, %p79
      %p81 = scmp.ne.s32.totalorder %s70, %s71
      %p82 = scmp.eq.s32.totalorder %s20, 0
      %p83 = por %p81, %p82
      %p84 = scmp.ne.s32.totalorder %s70, %s71
      %p85 = scmp.eq.s32.totalorder %s21, 1
      %p86 = por %p84, %p85
      %p88 = scmp.ne.s32.totalorder %s71, %s87
      %p89 = scmp.eq.s32.totalorder %s21, 0
      %p90 = por %p88, %p89
      %s92 = sadd.s32 %s91, 1
      %p95 = scmp.eq.s32.totalorder %s15, 1
      %p96 = scmp.ne.s32.totalorder %s91, %s93
      %p97 = scmp.eq.s32.totalorder %s15, 0
      %p98 = por %p96, %p97
      %p99 = scmp.ne.s32.totalorder %s91, %s93
      %p100 = scmp.eq.s32.totalorder %s20, 1
      %p101 = por %p99, %p100
      %p102 = scmp.ne.s32.totalorder %s93, %s94
      %p103 = scmp.eq.s32.totalorder %s20, 0
      %p104 = por %p102, %p103
      %p105 = scmp.ne.s32.totalorder %s93, %s94
      %p106 = scmp.eq.s32.totalorder %s21, 1
      %p107 = por %p105, %p106
      %p109 = scmp.ne.s32.totalorder %s94, %s108
      %p110 = scmp.eq.s32.totalorder %s21, 0
      %p111 = por %p109, %p110
      %s113 = sadd.s32 %s112, 1
      %p116 = scmp.eq.s32.totalorder %s15, 1
      %p117 = scmp.ne.s32.totalorder %s112, %s114
      %p118 = scmp.eq.s32.totalorder %s15, 0
      %p119 = por %p117, %p118
      %p120 = scmp.ne.s32.totalorder %s112, %s114
      %p121 = scmp.eq.s32.totalorder %s20, 1
      %p122 = por %p120, %p121
      %p123 = scmp.ne.s32.totalorder %s114, %s115
      %p124 = scmp.eq.s32.totalorder %s20, 0
      %p125 = por %p123, %p124
      %p126 = scmp.ne.s32.totalorder %s114, %s115
      %p127 = scmp.eq.s32.totalorder %s21, 1
      %p128 = por %p126, %p127
      %p130 = scmp.ne.s32.totalorder %s115, %s129
      %p131 = scmp.eq.s32.totalorder %s21, 0
      %p132 = por %p130, %p131
      %s134 = sadd.s32 %s133, 1
      %p137 = scmp.eq.s32.totalorder %s15, 1
      %p138 = scmp.ne.s32.totalorder %s133, %s135
      %p139 = scmp.eq.s32.totalorder %s15, 0
      %p140 = por %p138, %p139
      %p141 = scmp.ne.s32.totalorder %s133, %s135
      %p142 = scmp.eq.s32.totalorder %s20, 1
      %p143 = por %p141, %p142
      %p144 = scmp.ne.s32.totalorder %s135, %s136
      %p145 = scmp.eq.s32.totalorder %s20, 0
      %p146 = por %p144, %p145
      %p147 = scmp.ne.s32.totalorder %s135, %s136
      %p148 = scmp.eq.s32.totalorder %s21, 1
      %p149 = por %p147, %p148
      %p151 = scmp.ne.s32.totalorder %s136, %s150
      %p152 = scmp.eq.s32.totalorder %s21, 0
      %p153 = por %p151, %p152
      %s155 = sadd.s32 %s154, 1
      %p158 = scmp.eq.s32.totalorder %s15, 1
      %p159 = scmp.ne.s32.totalorder %s154, %s156
      %p160 = scmp.eq.s32.totalorder %s15, 0
      %p161 = por %p159, %p160
      %p162 = scmp.ne.s32.totalorder %s154, %s156
      %p163 = scmp.eq.s32.totalorder %s20, 1
      %p164 = por %p162, %p163
      %p165 = scmp.ne.s32.totalorder %s156, %s157
      %p166 = scmp.eq.s32.totalorder %s20, 0
      %p167 = por %p165, %p166
      %p168 = scmp.ne.s32.totalorder %s156, %s157
      %p169 = scmp.eq.s32.totalorder %s21, 1
      %p170 = por %p168, %p169
      %p172 = scmp.ne.s32.totalorder %s157, %s171
      %p173 = scmp.eq.s32.totalorder %s21, 0
      %p174 = por %p172, %p173
      %s175 = ssub.s32 %s22, %s34
      %s176 = ssub.s32 %s23, %s30
      %s177 = sor.u32 %s175, %s176
      %p178 = scmp.eq.s32.totalorder %s177, 0
      %s180 = sadd.s32 %s179, 1
      %s181 = scalar_select %p178, %s179, %s180
      %p184 = pneg %p178
      %p185 = scmp.eq.s32.totalorder %s15, 1
      %p186 = por %p184, %p185
      %p187 = scmp.ne.s32.totalorder %s179, %s182
      %p188 = scmp.eq.s32.totalorder %s15, 0
      %p189 = por %p187, %p188
      %p190 = scmp.ne.s32.totalorder %s179, %s182
      %p191 = scmp.eq.s32.totalorder %s20, 1
      %p192 = por %p190, %p191
      %p193 = scmp.ne.s32.totalorder %s182, %s183
      %p194 = scmp.eq.s32.totalorder %s20, 0
      %p195 = por %p193, %p194
      %p196 = scmp.ne.s32.totalorder %s182, %s183
      %p197 = scmp.eq.s32.totalorder %s21, 1
      %p198 = por %p196, %p197
      %p200 = scmp.ne.s32.totalorder %s183, %s199
      %p201 = scmp.eq.s32.totalorder %s21, 0
      %p202 = por %p200, %p201
      %p203 = scmp.le.s32.totalorder 1, %s15
      %p204 = scmp.lt.s32.totalorder %s15, 3
      %p205 = pnand %p203, %p204
      %p206 = pneg %p205
      // Predicated region
      $region9: #{tpu_custom_call.1} parent=5 // pred_check
        _
      $region10: #{tpu_custom_call.1} parent=5 // pred_check_branch
        %208 = sbr.rel (%p205) target = $region12
      $region11: #{tpu_custom_call.1} parent=5 // pred_region
        %s209 = ssub.s32 %s15, 1
        // Predicated region
        $region13: #{tpu_custom_call.1} parent=11 // pred_check
          %p210 = pneg %p104
        $region14: #{tpu_custom_call.1} parent=11 // pred_check_branch
          %212 = sbr.rel (%p210) target = $region16
        $region15: #{tpu_custom_call.1} parent=11 // pred_region
          _
        $region16: #{tpu_custom_call.1} parent=11 // pred_fallthru
          _
        // Predicated region
        $region17: #{tpu_custom_call.1} parent=11 // pred_check
          %p213 = pneg %p125
        $region18: #{tpu_custom_call.1} parent=11 // pred_check_branch
          %215 = sbr.rel (%p213) target = $region20
        $region19: #{tpu_custom_call.1} parent=11 // pred_region
          _
        $region20: #{tpu_custom_call.1} parent=11 // pred_fallthru
          _
        // Predicated region
        $region21: #{tpu_custom_call.1} parent=11 // pred_check
          %p216 = pneg %p146
        $region22: #{tpu_custom_call.1} parent=11 // pred_check_branch
          %218 = sbr.rel (%p216) target = $region24
        $region23: #{tpu_custom_call.1} parent=11 // pred_region
          _
        $region24: #{tpu_custom_call.1} parent=11 // pred_fallthru
          _
        // Predicated region
        $region25: #{tpu_custom_call.1} parent=11 // pred_check
          %p219 = pneg %p167
        $region26: #{tpu_custom_call.1} parent=11 // pred_check_branch
          %221 = sbr.rel (%p219) target = $region28
        $region27: #{tpu_custom_call.1} parent=11 // pred_region
          _
        $region28: #{tpu_custom_call.1} parent=11 // pred_fallthru
          _
      $region12: #{tpu_custom_call.1} parent=5 // pred_fallthru
        _
      %p222 = scmp.lt.s32.totalorder %s15, 2
      // Predicated region
      $region29: #{tpu_custom_call.1} parent=5 // pred_check
        %p223 = pneg %p222
      $region30: #{tpu_custom_call.1} parent=5 // pred_check_branch
        %225 = sbr.rel (%p223) target = $region32
      $region31: #{tpu_custom_call.1} parent=5 // pred_region
        // Predicated region
        $region33: #{tpu_custom_call.1} parent=31 // pred_check
          %p226 = pneg %p49
        $region34: #{tpu_custom_call.1} parent=31 // pred_check_branch
          %228 = sbr.rel (%p226) target = $region36
        $region35: #{tpu_custom_call.1} parent=31 // pred_region
          %s229 = smul.u32 34, %s23
          %p230 = scmp.lt.s32.totalorder %s22, 1
          %s231 = scalar_select %p230, %s22, 1
          %p232 = scmp.lt.s32.totalorder %s229, 33
          %s233 = scalar_select %p232, %s229, 33
          %s234 = smul.addr %s231, 34
          %s235 = sadd.s32 %s233, %s234
          %s236 = smul.addr %s235, 4
          %s237 = scalar_lea.vmem %s0, %s236
          %s238 = smul.u32 34, %s23
        $region36: #{tpu_custom_call.1} parent=31 // pred_fallthru
          _
        // Predicated region
        $region37: #{tpu_custom_call.1} parent=31 // pred_check
          %p239 = pneg %p77
        $region38: #{tpu_custom_call.1} parent=31 // pred_check_branch
          %241 = sbr.rel (%p239) target = $region40
        $region39: #{tpu_custom_call.1} parent=31 // pred_region
          %p242 = scmp.lt.s32.totalorder %s22, 1
          %s243 = scalar_select %p242, %s22, 1
          %p244 = scmp.lt.s32.totalorder %s23, 0
          %s245 = scalar_select %p244, %s23, 0
          %s246 = smul.addr %s245, 3
          %s247 = smul.addr %s243, 3
          %s248 = sadd.s32 %s246, %s247
          %s249 = smul.addr %s248, 4
          %s250 = scalar_lea.vmem %s1, %s249
        $region40: #{tpu_custom_call.1} parent=31 // pred_fallthru
          _
      $region32: #{tpu_custom_call.1} parent=5 // pred_fallthru
        _
      %p251 = scmp.le.s32.totalorder 1, %s15
      %p252 = scmp.lt.s32.totalorder %s15, 3
      %p253 = pnand %p251, %p252
      %p254 = pneg %p253
      // Predicated region
      $region41: #{tpu_custom_call.1} parent=5 // pred_check
        _
      $region42: #{tpu_custom_call.1} parent=5 // pred_check_branch
        %256 = sbr.rel (%p253) target = $region44
      $region43: #{tpu_custom_call.1} parent=5 // pred_region
        %s257 = ssub.s32 %s15, 1
        %s258 = smul.u32 34, %s25
        %p259 = scmp.lt.s32.totalorder %s24, 1
        %s260 = scalar_select %p259, %s24, 1
        %p261 = scmp.lt.s32.totalorder %s258, 33
        %s262 = scalar_select %p261, %s258, 33
        %s263 = smul.addr %s260, 34
        %s264 = sadd.s32 %s262, %s263
        %s265 = smul.addr %s264, 4
        %s266 = scalar_lea.vmem %s0, %s265
        %p267 = pneg %p55
        %p268 = pneg %p52
        %p269 = scmp.lt.s32.totalorder %s24, 1
        %s270 = scalar_select %p269, %s24, 1
        %p271 = scmp.lt.s32.totalorder %s25, 0
        %s272 = scalar_select %p271, %s25, 0
        %s273 = smul.addr %s272, 3
        %s274 = smul.addr %s270, 3
        %s275 = sadd.s32 %s273, %s274
        %s276 = smul.addr %s275, 4
        %s277 = scalar_lea.vmem %s1, %s276
        %p278 = pneg %p83
        %p279 = pneg %p80
        %p280 = pneg %p104
        %p281 = pneg %p101
        %p282 = pneg %p125
        %p283 = pneg %p122
        %p284 = pneg %p146
        %p285 = pneg %p143
        %p286 = pneg %p167
        %p287 = pneg %p164
        %p288 = pneg %p195
        %p289 = pneg %p192
        %s290 = sand.u32 %s182, 1
        %s291 = scalar_lea.sflag [#allocation4], %s290
        %s292 = sand.u32 %s182, 1
        %s293 = smul.addr %s292, 136
        %s294 = scalar_lea.vmem [#allocation3], %s293
        %s295 = smul.u32 34, %s25
        %p296 = scmp.lt.s32.totalorder %s24, 1
        %s297 = scalar_select %p296, %s24, 1
        %p298 = scmp.lt.s32.totalorder %s295, 33
        %s299 = scalar_select %p298, %s295, 33
        %s300 = smul.addr %s297, 34
        %s301 = sadd.s32 %s299, %s300
        %s302 = smul.addr %s301, 4
        %s303 = scalar_lea.vmem %s0, %s302
        %s304 = smul.u32 34, %s25
        %p305 = scmp.lt.s32.totalorder %s24, 1
        %s306 = scalar_select %p305, %s24, 1
        %p307 = scmp.lt.s32.totalorder %s25, 0
        %s308 = scalar_select %p307, %s25, 0
        %s309 = smul.addr %s308, 3
        %s310 = smul.addr %s306, 3
        %s311 = sadd.s32 %s309, %s310
        %s312 = smul.addr %s311, 4
        %s313 = scalar_lea.vmem %s1, %s312
        %v315 = vld [vmem:[%s303] sm:$0xf]
        %v316 = vld [vmem:[%s303 + $0x4] sm:$0xf]
        %v317 = vld [vmem:[%s303 + $0x8] sm:$0xf]
        %v318 = vld [vmem:[%s303 + $0xc] sm:$0xf]
        %v319 = vld [vmem:[%s303 + $0x10] sm:$0xf]
        %v320 = vld [vmem:[%s303 + $0x14] sm:$0xf]
        %v321 = vld [vmem:[%s303 + $0x18] sm:$0xf]
        %v322 = vld [vmem:[%s303 + $0x1c] sm:$0xf]
        %v323 = vld [vmem:[%s303 + $0x20] sm:$0xf]
        %v324 = vld [vmem:[%s303 + $0x24] sm:$0xf]
        %v325 = vld [vmem:[%s303 + $0x28] sm:$0xf]
        %v326 = vld [vmem:[%s303 + $0x2c] sm:$0xf]
        %v327 = vld [vmem:[%s303 + $0x30] sm:$0xf]
        %v328 = vld [vmem:[%s303 + $0x34] sm:$0xf]
        %v329 = vld [vmem:[%s303 + $0x38] sm:$0xf]
        %v330 = vld [vmem:[%s303 + $0x3c] sm:$0xf]
        %v331 = vld [vmem:[%s303 + $0x40] sm:$0xf]
        %v332 = vld [vmem:[%s303 + $0x44] sm:$0xf]
        %v333 = vld [vmem:[%s303 + $0x48] sm:$0xf]
        %v334 = vld [vmem:[%s303 + $0x4c] sm:$0xf]
        %v335 = vld [vmem:[%s303 + $0x50] sm:$0xf]
        %v336 = vld [vmem:[%s303 + $0x54] sm:$0xf]
        %v337 = vld [vmem:[%s303 + $0x58] sm:$0xf]
        %v338 = vld [vmem:[%s303 + $0x5c] sm:$0xf]
        %v339 = vld [vmem:[%s303 + $0x60] sm:$0xf]
        %v340 = vld [vmem:[%s303 + $0x64] sm:$0xf]
        %v341 = vld [vmem:[%s303 + $0x68] sm:$0xf]
        %v342 = vld [vmem:[%s303 + $0x6c] sm:$0xf]
        %v343 = vld [vmem:[%s303 + $0x70] sm:$0xf]
        %v344 = vld [vmem:[%s303 + $0x74] sm:$0xf]
        %v345 = vld [vmem:[%s303 + $0x78] sm:$0xf]
        %v346 = vld [vmem:[%s303 + $0x7c] sm:$0xf]
        %v347 = vld [vmem:[%s303 + $0x80] sm:$0xf]
        %v348 = vld [vmem:[%s303 + $0x84] sm:$0xf]
        %vm349 = vcmask 93184
        %350 = vst.msk [vmem:[#allocation2] sm:$0xf] %vm349, %v315
        %351 = vst.msk [vmem:[#allocation2 + $0x4] sm:$0xf] %vm349, %v316
        %352 = vst.msk [vmem:[#allocation2 + $0x8] sm:$0xf] %vm349, %v317
        %353 = vst.msk [vmem:[#allocation2 + $0xc] sm:$0xf] %vm349, %v318
        %354 = vst.msk [vmem:[#allocation2 + $0x10] sm:$0xf] %vm349, %v319
        %355 = vst.msk [vmem:[#allocation2 + $0x14] sm:$0xf] %vm349, %v320
        %356 = vst.msk [vmem:[#allocation2 + $0x18] sm:$0xf] %vm349, %v321
        %357 = vst.msk [vmem:[#allocation2 + $0x1c] sm:$0xf] %vm349, %v322
        %358 = vst.msk [vmem:[#allocation2 + $0x20] sm:$0xf] %vm349, %v323
        %359 = vst.msk [vmem:[#allocation2 + $0x24] sm:$0xf] %vm349, %v324
        %360 = vst.msk [vmem:[#allocation2 + $0x28] sm:$0xf] %vm349, %v325
        %361 = vst.msk [vmem:[#allocation2 + $0x2c] sm:$0xf] %vm349, %v326
        %362 = vst.msk [vmem:[#allocation2 + $0x30] sm:$0xf] %vm349, %v327
        %363 = vst.msk [vmem:[#allocation2 + $0x34] sm:$0xf] %vm349, %v328
        %364 = vst.msk [vmem:[#allocation2 + $0x38] sm:$0xf] %vm349, %v329
        %365 = vst.msk [vmem:[#allocation2 + $0x3c] sm:$0xf] %vm349, %v330
        %366 = vst.msk [vmem:[#allocation2 + $0x40] sm:$0xf] %vm349, %v331
        %367 = vst.msk [vmem:[#allocation2 + $0x44] sm:$0xf] %vm349, %v332
        %368 = vst.msk [vmem:[#allocation2 + $0x48] sm:$0xf] %vm349, %v333
        %369 = vst.msk [vmem:[#allocation2 + $0x4c] sm:$0xf] %vm349, %v334
        %370 = vst.msk [vmem:[#allocation2 + $0x50] sm:$0xf] %vm349, %v335
        %371 = vst.msk [vmem:[#allocation2 + $0x54] sm:$0xf] %vm349, %v336
        %372 = vst.msk [vmem:[#allocation2 + $0x58] sm:$0xf] %vm349, %v337
        %373 = vst.msk [vmem:[#allocation2 + $0x5c] sm:$0xf] %vm349, %v338
        %374 = vst.msk [vmem:[#allocation2 + $0x60] sm:$0xf] %vm349, %v339
        %375 = vst.msk [vmem:[#allocation2 + $0x64] sm:$0xf] %vm349, %v340
        %376 = vst.msk [vmem:[#allocation2 + $0x68] sm:$0xf] %vm349, %v341
        %377 = vst.msk [vmem:[#allocation2 + $0x6c] sm:$0xf] %vm349, %v342
        %378 = vst.msk [vmem:[#allocation2 + $0x70] sm:$0xf] %vm349, %v343
        %379 = vst.msk [vmem:[#allocation2 + $0x74] sm:$0xf] %vm349, %v344
        %380 = vst.msk [vmem:[#allocation2 + $0x78] sm:$0xf] %vm349, %v345
        %381 = vst.msk [vmem:[#allocation2 + $0x7c] sm:$0xf] %vm349, %v346
        %382 = vst.msk [vmem:[#allocation2 + $0x80] sm:$0xf] %vm349, %v347
        %383 = vst.msk [vmem:[#allocation2 + $0x84] sm:$0xf] %vm349, %v348
        %v384 = vld [vmem:[%s313] sm:$0xf]
        %v385 = vld [vmem:[%s313 + $0x4] sm:$0xf]
        %v386 = vld [vmem:[%s313 + $0x8] sm:$0x1]
        %387 = vst.msk [vmem:[#allocation2 + $0x88] sm:$0xf] %vm349, %v384
        %388 = vst.msk [vmem:[#allocation2 + $0x8c] sm:$0xf] %vm349, %v385
        %vm389 = vcmask 90112
        %vm390 = vsmask.f32 256
        %vm391 = vmand %vm389, %vm390
        %v392 = vld [vmem:[#allocation2 + $0x90] sm:$0x1]
        %v393 = vsel %vm391, %v386, %v392
        %394 = vst [vmem:[#allocation2 + $0x90] sm:$0x1] %v393
        %vm395 = vcmask 93184
        %vm396 = vsmask.f32 7938
        %vm397 = vmand %vm395, %vm396
        %v398 = vld [vmem:[#allocation2 + $0x90] sm:$0xf]
        %v399 = vsel %vm397, 0, %v398
        %400 = vst [vmem:[#allocation2 + $0x90] sm:$0xf] %v399
        %401 = vst.msk [vmem:[#allocation2 + $0x94] sm:$0xf] %vm349, 0
        %vm402 = vcmask 90112
        %403 = vst.msk [vmem:[#allocation2 + $0x98] sm:$0x1] %vm402, 0
        %v404 = vld [vmem:[#allocation2] sm:$0xf]
        %v405 = vld [vmem:[#allocation2 + $0x4] sm:$0xf]
        %v406 = vld [vmem:[#allocation2 + $0x8] sm:$0xf]
        %v407 = vld [vmem:[#allocation2 + $0xc] sm:$0xf]
        %v408 = vld [vmem:[#allocation2 + $0x10] sm:$0xf]
        %v409 = vld [vmem:[#allocation2 + $0x14] sm:$0xf]
        %v410 = vld [vmem:[#allocation2 + $0x18] sm:$0xf]
        %v411 = vld [vmem:[#allocation2 + $0x1c] sm:$0xf]
        %v412 = vld [vmem:[#allocation2 + $0x20] sm:$0xf]
        %v413 = vld [vmem:[#allocation2 + $0x24] sm:$0xf]
        %v414 = vld [vmem:[#allocation2 + $0x28] sm:$0xf]
        %v415 = vld [vmem:[#allocation2 + $0x2c] sm:$0xf]
        %v416 = vld [vmem:[#allocation2 + $0x30] sm:$0xf]
        %v417 = vld [vmem:[#allocation2 + $0x34] sm:$0xf]
        %v418 = vld [vmem:[#allocation2 + $0x38] sm:$0xf]
        %v419 = vld [vmem:[#allocation2 + $0x3c] sm:$0xf]
        %v420 = vld [vmem:[#allocation2 + $0x40] sm:$0xf]
        %v421 = vld [vmem:[#allocation2 + $0x44] sm:$0xf]
        %v422 = vld [vmem:[#allocation2 + $0x48] sm:$0xf]
        %v423 = vld [vmem:[#allocation2 + $0x4c] sm:$0xf]
        %v424 = vld [vmem:[#allocation2 + $0x50] sm:$0xf]
        %v425 = vld [vmem:[#allocation2 + $0x54] sm:$0xf]
        %v426 = vld [vmem:[#allocation2 + $0x58] sm:$0xf]
        %v427 = vld [vmem:[#allocation2 + $0x5c] sm:$0xf]
        %v428 = vld [vmem:[#allocation2 + $0x60] sm:$0xf]
        %v429 = vld [vmem:[#allocation2 + $0x64] sm:$0xf]
        %v430 = vld [vmem:[#allocation2 + $0x68] sm:$0xf]
        %v431 = vld [vmem:[#allocation2 + $0x6c] sm:$0xf]
        %v432 = vld [vmem:[#allocation2 + $0x70] sm:$0xf]
        %v433 = vld [vmem:[#allocation2 + $0x74] sm:$0xf]
        %v434 = vld [vmem:[#allocation2 + $0x78] sm:$0xf]
        %v435 = vld [vmem:[#allocation2 + $0x7c] sm:$0xf]
        %v436 = vld [vmem:[#allocation2 + $0x80] sm:$0xf]
        %v437 = vld [vmem:[#allocation2 + $0x84] sm:$0xf]
        %v438 = vld [vmem:[#allocation2 + $0x88] sm:$0x1]
        %v439 = vld [vmem:[#allocation2 + $0x88] sm:$0xf]
        %v440 = vld [vmem:[#allocation2 + $0x8c] sm:$0xf]
        %v441 = vld [vmem:[#allocation2 + $0x90] sm:$0x1]
        %v442 = vld [vmem:[#allocation2 + $0x8] sm:$0xe]
        %v477 = vunpack.c.l.b16 %v404
        %v478 = vunpack.c.l.b16 %v405
        %v479 = vunpack.c.l.b16 %v406
        %v480 = vunpack.c.l.b16 %v407
        %v481 = vunpack.c.l.b16 %v408
        %v482 = vunpack.c.l.b16 %v409
        %v483 = vunpack.c.l.b16 %v410
        %v484 = vunpack.c.l.b16 %v411
        %v485 = vunpack.c.l.b16 %v412
        %v486 = vunpack.c.l.b16 %v413
        %v487 = vunpack.c.l.b16 %v414
        %v488 = vunpack.c.l.b16 %v415
        %v489 = vunpack.c.l.b16 %v416
        %v490 = vunpack.c.l.b16 %v417
        %v491 = vunpack.c.l.b16 %v418
        %v492 = vunpack.c.l.b16 %v419
        %v493 = vunpack.c.l.b16 %v420
        %v494 = vunpack.c.l.b16 %v421
        %v495 = vunpack.c.l.b16 %v422
        %v496 = vunpack.c.l.b16 %v423
        %v497 = vunpack.c.l.b16 %v424
        %v498 = vunpack.c.l.b16 %v425
        %v499 = vunpack.c.l.b16 %v426
        %v500 = vunpack.c.l.b16 %v427
        %v501 = vunpack.c.l.b16 %v428
        %v502 = vunpack.c.l.b16 %v429
        %v503 = vunpack.c.l.b16 %v430
        %v504 = vunpack.c.l.b16 %v431
        %v505 = vunpack.c.l.b16 %v432
        %v506 = vunpack.c.l.b16 %v433
        %v507 = vunpack.c.l.b16 %v434
        %v508 = vunpack.c.l.b16 %v435
        %v509 = vunpack.c.l.b16 %v436
        %v510 = vunpack.c.l.b16 %v437
        %v511 = vpack.c.b16 %v478, %v477
        %v512 = vpack.c.b16 %v480, %v479
        %v513 = vpack.c.b16 %v482, %v481
        %v514 = vpack.c.b16 %v484, %v483
        %v515 = vpack.c.b16 %v486, %v485
        %v516 = vpack.c.b16 %v488, %v487
        %v517 = vpack.c.b16 %v490, %v489
        %v518 = vpack.c.b16 %v492, %v491
        %v519 = vpack.c.b16 %v494, %v493
        %v520 = vpack.c.b16 %v496, %v495
        %v521 = vpack.c.b16 %v498, %v497
        %v522 = vpack.c.b16 %v500, %v499
        %v523 = vpack.c.b16 %v502, %v501
        %v524 = vpack.c.b16 %v504, %v503
        %v525 = vpack.c.b16 %v506, %v505
        %v526 = vpack.c.b16 %v508, %v507
        %v527 = vpack.c.b16 %v510, %v509
        %v529 = vunpack.c.l.b16 %v438
        %v530 = vpack.c.b16 %v529, %v529
        %vm531 = vsmask.f32 7424
        %v533 = vshrl.u32 %v511, 16
        %v535 = vshll.u32 %v511, 16
        %v537 = vrot.slane %v535, 1
        %v538 = vor.u32 %v533, %v537
        %v540 = vshll.u32 %v512, 16
        %v542 = vrot.slane %v540, 1
        %v543 = vsel %vm531, %v538, %v542
        %v544 = vshrl.u32 %v512, 16
        %v546 = vor.u32 %v544, %v542
        %v548 = vshll.u32 %v513, 16
        %v550 = vrot.slane %v548, 1
        %v551 = vsel %vm531, %v546, %v550
        %v552 = vshrl.u32 %v513, 16
        %v554 = vor.u32 %v552, %v550
        %v556 = vshll.u32 %v514, 16
        %v558 = vrot.slane %v556, 1
        %v559 = vsel %vm531, %v554, %v558
        %v560 = vshrl.u32 %v514, 16
        %v562 = vor.u32 %v560, %v558
        %v564 = vshll.u32 %v515, 16
        %v566 = vrot.slane %v564, 1
        %v567 = vsel %vm531, %v562, %v566
        %v568 = vshrl.u32 %v515, 16
        %v570 = vor.u32 %v568, %v566
        %v572 = vshll.u32 %v516, 16
        %v574 = vrot.slane %v572, 1
        %v575 = vsel %vm531, %v570, %v574
        %v576 = vshrl.u32 %v516, 16
        %v578 = vor.u32 %v576, %v574
        %v580 = vshll.u32 %v517, 16
        %v582 = vrot.slane %v580, 1
        %v583 = vsel %vm531, %v578, %v582
        %v584 = vshrl.u32 %v517, 16
        %v586 = vor.u32 %v584, %v582
        %v588 = vshll.u32 %v518, 16
        %v590 = vrot.slane %v588, 1
        %v591 = vsel %vm531, %v586, %v590
        %v592 = vshrl.u32 %v518, 16
        %v594 = vor.u32 %v592, %v590
        %v596 = vshll.u32 %v519, 16
        %v598 = vrot.slane %v596, 1
        %v599 = vsel %vm531, %v594, %v598
        %v600 = vshrl.u32 %v519, 16
        %v602 = vor.u32 %v600, %v598
        %v604 = vshll.u32 %v520, 16
        %v606 = vrot.slane %v604, 1
        %v607 = vsel %vm531, %v602, %v606
        %v608 = vshrl.u32 %v520, 16
        %v610 = vor.u32 %v608, %v606
        %v612 = vshll.u32 %v521, 16
        %v614 = vrot.slane %v612, 1
        %v615 = vsel %vm531, %v610, %v614
        %v616 = vshrl.u32 %v521, 16
        %v618 = vor.u32 %v616, %v614
        %v620 = vshll.u32 %v522, 16
        %v622 = vrot.slane %v620, 1
        %v623 = vsel %vm531, %v618, %v622
        %v624 = vshrl.u32 %v522, 16
        %v626 = vor.u32 %v624, %v622
        %v628 = vshll.u32 %v523, 16
        %v630 = vrot.slane %v628, 1
        %v631 = vsel %vm531, %v626, %v630
        %v632 = vshrl.u32 %v523, 16
        %v634 = vor.u32 %v632, %v630
        %v636 = vshll.u32 %v524, 16
        %v638 = vrot.slane %v636, 1
        %v639 = vsel %vm531, %v634, %v638
        %v640 = vshrl.u32 %v524, 16
        %v642 = vor.u32 %v640, %v638
        %v644 = vshll.u32 %v525, 16
        %v646 = vrot.slane %v644, 1
        %v647 = vsel %vm531, %v642, %v646
        %v648 = vshrl.u32 %v525, 16
        %v650 = vor.u32 %v648, %v646
        %v652 = vshll.u32 %v526, 16
        %v654 = vrot.slane %v652, 1
        %v655 = vsel %vm531, %v650, %v654
        %v656 = vshrl.u32 %v526, 16
        %v658 = vor.u32 %v656, %v654
        %v660 = vshll.u32 %v527, 16
        %v662 = vrot.slane %v660, 1
        %v663 = vsel %vm531, %v658, %v662
        %v664 = vshrl.u32 %v527, 16
        %v666 = vor.u32 %v664, %v662
        %v668 = vshll.u32 %v530, 16
        %v670 = vrot.slane %v668, 1
        %v671 = vsel %vm531, %v666, %v670
        %672 = vrot.lane.b32.xlu0 %v543, 12
        %v673 = vpop.permute.xlu0 %672
        %674 = vrot.lane.b32.xlu0 %v551, 12
        %v675 = vpop.permute.xlu0 %674
        %676 = vrot.lane.b32.xlu0 %v559, 12
        %v677 = vpop.permute.xlu0 %676
        %678 = vrot.lane.b32.xlu0 %v567, 12
        %v679 = vpop.permute.xlu0 %678
        %680 = vrot.lane.b32.xlu0 %v575, 12
        %v681 = vpop.permute.xlu0 %680
        %682 = vrot.lane.b32.xlu0 %v583, 12
        %v683 = vpop.permute.xlu0 %682
        %684 = vrot.lane.b32.xlu0 %v591, 12
        %v685 = vpop.permute.xlu0 %684
        %686 = vrot.lane.b32.xlu0 %v599, 12
        %v687 = vpop.permute.xlu0 %686
        %688 = vrot.lane.b32.xlu0 %v607, 12
        %v689 = vpop.permute.xlu0 %688
        %690 = vrot.lane.b32.xlu0 %v615, 12
        %v691 = vpop.permute.xlu0 %690
        %692 = vrot.lane.b32.xlu0 %v623, 12
        %v693 = vpop.permute.xlu0 %692
        %694 = vrot.lane.b32.xlu0 %v631, 12
        %v695 = vpop.permute.xlu0 %694
        %696 = vrot.lane.b32.xlu0 %v639, 12
        %v697 = vpop.permute.xlu0 %696
        %698 = vrot.lane.b32.xlu0 %v647, 12
        %v699 = vpop.permute.xlu0 %698
        %700 = vrot.lane.b32.xlu0 %v655, 12
        %v701 = vpop.permute.xlu0 %700
        %702 = vrot.lane.b32.xlu0 %v663, 12
        %v703 = vpop.permute.xlu0 %702
        %704 = vrot.lane.b32.xlu0 %v671, 12
        %v705 = vpop.permute.xlu0 %704
        %v709 = vunpack.c.l.b16 %v439
        %v710 = vunpack.c.l.b16 %v440
        %v711 = vunpack.c.l.b16 %v441
        %v712 = vpack.c.b16 %v710, %v709
        %v713 = vpack.c.b16 %v711, %v711
        %v715 = vshll.u32 %v712, 16
        %v717 = vrot.slane %v715, 1
        %v718 = vsel %vm531, %v666, %v717
        %v719 = vshrl.u32 %v712, 16
        %v721 = vor.u32 %v719, %v717
        %v723 = vshll.u32 %v713, 16
        %v725 = vrot.slane %v723, 1
        %v726 = vsel %vm531, %v721, %v725
        %727 = vrot.lane.b32.xlu0 %v551, 24
        %v728 = vpop.permute.xlu0 %727
        %729 = vrot.lane.b32.xlu0 %v559, 24
        %v730 = vpop.permute.xlu0 %729
        %731 = vrot.lane.b32.xlu0 %v567, 24
        %v732 = vpop.permute.xlu0 %731
        %733 = vrot.lane.b32.xlu0 %v575, 24
        %v734 = vpop.permute.xlu0 %733
        %735 = vrot.lane.b32.xlu0 %v583, 24
        %v736 = vpop.permute.xlu0 %735
        %737 = vrot.lane.b32.xlu0 %v591, 24
        %v738 = vpop.permute.xlu0 %737
        %739 = vrot.lane.b32.xlu0 %v599, 24
        %v740 = vpop.permute.xlu0 %739
        %741 = vrot.lane.b32.xlu0 %v607, 24
        %v742 = vpop.permute.xlu0 %741
        %743 = vrot.lane.b32.xlu0 %v615, 24
        %v744 = vpop.permute.xlu0 %743
        %745 = vrot.lane.b32.xlu0 %v623, 24
        %v746 = vpop.permute.xlu0 %745
        %747 = vrot.lane.b32.xlu0 %v631, 24
        %v748 = vpop.permute.xlu0 %747
        %749 = vrot.lane.b32.xlu0 %v639, 24
        %v750 = vpop.permute.xlu0 %749
        %751 = vrot.lane.b32.xlu0 %v647, 24
        %v752 = vpop.permute.xlu0 %751
        %753 = vrot.lane.b32.xlu0 %v655, 24
        %v754 = vpop.permute.xlu0 %753
        %755 = vrot.lane.b32.xlu0 %v663, 24
        %v756 = vpop.permute.xlu0 %755
        %757 = vrot.lane.b32.xlu0 %v718, 24
        %v758 = vpop.permute.xlu0 %757
        %759 = vrot.lane.b32.xlu0 %v726, 24
        %v760 = vpop.permute.xlu0 %759
        %v762 = vunpack.c.l.b16 %v442
        %v763 = vpack.c.b16 %v480, %v762
        %vm764 = vcmask 1046528
        %v765 = vrot.slane %v763, 1
        %v766 = vrot.slane %v513, 1
        %v767 = vsel %vm764, %v765, %v766
        %v768 = vrot.slane %v514, 1
        %v769 = vsel %vm764, %v766, %v768
        %v770 = vrot.slane %v515, 1
        %v771 = vsel %vm764, %v768, %v770
        %v772 = vrot.slane %v516, 1
        %v773 = vsel %vm764, %v770, %v772
        %v774 = vrot.slane %v517, 1
        %v775 = vsel %vm764, %v772, %v774
        %v776 = vrot.slane %v518, 1
        %v777 = vsel %vm764, %v774, %v776
        %v778 = vrot.slane %v519, 1
        %v779 = vsel %vm764, %v776, %v778
        %v780 = vrot.slane %v520, 1
        %v781 = vsel %vm764, %v778, %v780
        %v782 = vrot.slane %v521, 1
        %v783 = vsel %vm764, %v780, %v782
        %v784 = vrot.slane %v522, 1
        %v785 = vsel %vm764, %v782, %v784
        %v786 = vrot.slane %v523, 1
        %v787 = vsel %vm764, %v784, %v786
        %v788 = vrot.slane %v524, 1
        %v789 = vsel %vm764, %v786, %v788
        %v790 = vrot.slane %v525, 1
        %v791 = vsel %vm764, %v788, %v790
        %v792 = vrot.slane %v526, 1
        %v793 = vsel %vm764, %v790, %v792
        %v794 = vrot.slane %v527, 1
        %v795 = vsel %vm764, %v792, %v794
        %v796 = vrot.slane %v712, 1
        %v797 = vsel %vm764, %v794, %v796
        %v798 = vrot.slane %v713, 1
        %v799 = vsel %vm764, %v796, %v798
        %800 = vrot.lane.b32.xlu0 %v767, 36
        %v801 = vpop.permute.xlu0 %800
        %802 = vrot.lane.b32.xlu0 %v769, 36
        %v803 = vpop.permute.xlu0 %802
        %804 = vrot.lane.b32.xlu0 %v771, 36
        %v805 = vpop.permute.xlu0 %804
        %806 = vrot.lane.b32.xlu0 %v773, 36
        %v807 = vpop.permute.xlu0 %806
        %808 = vrot.lane.b32.xlu0 %v775, 36
        %v809 = vpop.permute.xlu0 %808
        %810 = vrot.lane.b32.xlu0 %v777, 36
        %v811 = vpop.permute.xlu0 %810
        %812 = vrot.lane.b32.xlu0 %v779, 36
        %v813 = vpop.permute.xlu0 %812
        %814 = vrot.lane.b32.xlu0 %v781, 36
        %v815 = vpop.permute.xlu0 %814
        %816 = vrot.lane.b32.xlu0 %v783, 36
        %v817 = vpop.permute.xlu0 %816
        %818 = vrot.lane.b32.xlu0 %v785, 36
        %v819 = vpop.permute.xlu0 %818
        %820 = vrot.lane.b32.xlu0 %v787, 36
        %v821 = vpop.permute.xlu0 %820
        %822 = vrot.lane.b32.xlu0 %v789, 36
        %v823 = vpop.permute.xlu0 %822
        %824 = vrot.lane.b32.xlu0 %v791, 36
        %v825 = vpop.permute.xlu0 %824
        %826 = vrot.lane.b32.xlu0 %v793, 36
        %v827 = vpop.permute.xlu0 %826
        %828 = vrot.lane.b32.xlu0 %v795, 36
        %v829 = vpop.permute.xlu0 %828
        %830 = vrot.lane.b32.xlu0 %v797, 36
        %v831 = vpop.permute.xlu0 %830
        %832 = vrot.lane.b32.xlu0 %v799, 36
        %v833 = vpop.permute.xlu0 %832
        %vm834 = vcmask 97280
        %v836 = vsel %vm834, %v511, %v673
        %v838 = vsel %vm834, %v512, %v675
        %v840 = vsel %vm834, %v513, %v677
        %v842 = vsel %vm834, %v514, %v679
        %v844 = vsel %vm834, %v515, %v681
        %v846 = vsel %vm834, %v516, %v683
        %v848 = vsel %vm834, %v517, %v685
        %v850 = vsel %vm834, %v518, %v687
        %v852 = vsel %vm834, %v519, %v689
        %v854 = vsel %vm834, %v520, %v691
        %v856 = vsel %vm834, %v521, %v693
        %v858 = vsel %vm834, %v522, %v695
        %v860 = vsel %vm834, %v523, %v697
        %v862 = vsel %vm834, %v524, %v699
        %v864 = vsel %vm834, %v525, %v701
        %v866 = vsel %vm834, %v526, %v703
        %v868 = vsel %vm834, %v527, %v705
        %vm869 = vcmask 195584
        %v871 = vsel %vm869, %v836, %v728
        %v873 = vsel %vm869, %v838, %v730
        %v875 = vsel %vm869, %v840, %v732
        %v877 = vsel %vm869, %v842, %v734
        %v879 = vsel %vm869, %v844, %v736
        %v881 = vsel %vm869, %v846, %v738
        %v883 = vsel %vm869, %v848, %v740
        %v885 = vsel %vm869, %v850, %v742
        %v887 = vsel %vm869, %v852, %v744
        %v889 = vsel %vm869, %v854, %v746
        %v891 = vsel %vm869, %v856, %v748
        %v893 = vsel %vm869, %v858, %v750
        %v895 = vsel %vm869, %v860, %v752
        %v897 = vsel %vm869, %v862, %v754
        %v899 = vsel %vm869, %v864, %v756
        %v901 = vsel %vm869, %v866, %v758
        %v903 = vsel %vm869, %v868, %v760
        %vm904 = vcmask 293888
        %v906 = vsel %vm904, %v871, %v801
        %v908 = vsel %vm904, %v873, %v803
        %v910 = vsel %vm904, %v875, %v805
        %v912 = vsel %vm904, %v877, %v807
        %v914 = vsel %vm904, %v879, %v809
        %v916 = vsel %vm904, %v881, %v811
        %v918 = vsel %vm904, %v883, %v813
        %v920 = vsel %vm904, %v885, %v815
        %v922 = vsel %vm904, %v887, %v817
        %v924 = vsel %vm904, %v889, %v819
        %v926 = vsel %vm904, %v891, %v821
        %v928 = vsel %vm904, %v893, %v823
        %v930 = vsel %vm904, %v895, %v825
        %v932 = vsel %vm904, %v897, %v827
        %v934 = vsel %vm904, %v899, %v829
        %v936 = vsel %vm904, %v901, %v831
        %v938 = vsel %vm904, %v903, %v833
        %v939 = vld [vmem:[%s2] sm:$0xf]
        %v940 = vld [vmem:[%s2 + $0x4] sm:$0xf]
        %v941 = vld [vmem:[%s2 + $0x8] sm:$0xf]
        %v942 = vld [vmem:[%s2 + $0xc] sm:$0xf]
        %v943 = vld [vmem:[%s2 + $0x10] sm:$0xf]
        %v944 = vld [vmem:[%s2 + $0x14] sm:$0xf]
        %v945 = vld [vmem:[%s5] sm:$0x1]
        %v947 = vperm.slane %v945, 0
        %v955 = vunpack.c.l.b16 %v939
        %v956 = vunpack.c.l.b16 %v940
        %v957 = vunpack.c.l.b16 %v941
        %v958 = vunpack.c.l.b16 %v942
        %v959 = vunpack.c.l.b16 %v943
        %v960 = vunpack.c.l.b16 %v944
        %v961 = vpack.c.b16 %v956, %v955
        %v962 = vpack.c.b16 %v958, %v957
        %v963 = vpack.c.b16 %v960, %v959
        %vm967 = vcmask 392192
        %v968 = vsel %vm967, %v906, 0
        %v970 = vsel %vm967, %v908, 0
        %v972 = vsel %vm967, %v910, 0
        %v974 = vsel %vm967, %v912, 0
        %v976 = vsel %vm967, %v914, 0
        %v978 = vsel %vm967, %v916, 0
        %v980 = vsel %vm967, %v918, 0
        %v982 = vsel %vm967, %v920, 0
        %v984 = vsel %vm967, %v922, 0
        %v986 = vsel %vm967, %v924, 0
        %v988 = vsel %vm967, %v926, 0
        %v990 = vsel %vm967, %v928, 0
        %v992 = vsel %vm967, %v930, 0
        %v994 = vsel %vm967, %v932, 0
        %v996 = vsel %vm967, %v934, 0
        %v998 = vsel %vm967, %v936, 0
        %v1000 = vsel %vm967, %v938, 0
        %1002 = vmatpush.bf16.msra.mxu0 0
        %1003 = vmatpush.bf16.msra.mxu0 0
        %1004 = vmatpush.bf16.msra.mxu0 0
        %1005 = vmatpush.bf16.msra.mxu0 0
        %1006 = vmatpush.bf16.msra.mxu0 0
        %1007 = vmatpush.bf16.msra.mxu0 %v963
        %1008 = vmatpush.bf16.msra.mxu0 %v962
        %1009 = vmatpush.bf16.msra.mxu0 %v961
        %1010 = vmatmul.bf16.gmra.mxu0 %v968
        %v1011 = vpop.f32.mrf.mxu0
        %v1012 = vadd.f32 %v947, %v1011
        %v1013 = vpop.f32.mrf.mxu0
        %v1014 = vadd.f32 %v947, %v1013
        %1015 = vmatmul.bf16.gmra.mxu0 %v970
        %v1016 = vpop.f32.mrf.mxu0
        %v1017 = vadd.f32 %v947, %v1016
        %v1018 = vpop.f32.mrf.mxu0
        %v1019 = vadd.f32 %v947, %v1018
        %1020 = vmatmul.bf16.gmra.mxu0 %v972
        %v1021 = vpop.f32.mrf.mxu0
        %v1022 = vadd.f32 %v947, %v1021
        %v1023 = vpop.f32.mrf.mxu0
        %v1024 = vadd.f32 %v947, %v1023
        %1025 = vmatmul.bf16.gmra.mxu0 %v974
        %v1026 = vpop.f32.mrf.mxu0
        %v1027 = vadd.f32 %v947, %v1026
        %v1028 = vpop.f32.mrf.mxu0
        %v1029 = vadd.f32 %v947, %v1028
        %1030 = vmatmul.bf16.gmra.mxu0 %v976
        %v1031 = vpop.f32.mrf.mxu0
        %v1032 = vadd.f32 %v947, %v1031
        %v1033 = vpop.f32.mrf.mxu0
        %v1034 = vadd.f32 %v947, %v1033
        %1035 = vmatmul.bf16.gmra.mxu0 %v978
        %v1036 = vpop.f32.mrf.mxu0
        %v1037 = vadd.f32 %v947, %v1036
        %v1038 = vpop.f32.mrf.mxu0
        %v1039 = vadd.f32 %v947, %v1038
        %1040 = vmatmul.bf16.gmra.mxu0 %v980
        %v1041 = vpop.f32.mrf.mxu0
        %v1042 = vadd.f32 %v947, %v1041
        %v1043 = vpop.f32.mrf.mxu0
        %v1044 = vadd.f32 %v947, %v1043
        %1045 = vmatmul.bf16.gmra.mxu0 %v982
        %v1046 = vpop.f32.mrf.mxu0
        %v1047 = vadd.f32 %v947, %v1046
        %v1048 = vpop.f32.mrf.mxu0
        %v1049 = vadd.f32 %v947, %v1048
        %1050 = vmatmul.bf16.gmra.mxu0 %v984
        %v1051 = vpop.f32.mrf.mxu0
        %v1052 = vadd.f32 %v947, %v1051
        %v1053 = vpop.f32.mrf.mxu0
        %v1054 = vadd.f32 %v947, %v1053
        %1055 = vmatmul.bf16.gmra.mxu0 %v986
        %v1056 = vpop.f32.mrf.mxu0
        %v1057 = vadd.f32 %v947, %v1056
        %v1058 = vpop.f32.mrf.mxu0
        %v1059 = vadd.f32 %v947, %v1058
        %1060 = vmatmul.bf16.gmra.mxu0 %v988
        %v1061 = vpop.f32.mrf.mxu0
        %v1062 = vadd.f32 %v947, %v1061
        %v1063 = vpop.f32.mrf.mxu0
        %v1064 = vadd.f32 %v947, %v1063
        %1065 = vmatmul.bf16.gmra.mxu0 %v990
        %v1066 = vpop.f32.mrf.mxu0
        %v1067 = vadd.f32 %v947, %v1066
        %v1068 = vpop.f32.mrf.mxu0
        %v1069 = vadd.f32 %v947, %v1068
        %1070 = vmatmul.bf16.gmra.mxu0 %v992
        %v1071 = vpop.f32.mrf.mxu0
        %v1072 = vadd.f32 %v947, %v1071
        %v1073 = vpop.f32.mrf.mxu0
        %v1074 = vadd.f32 %v947, %v1073
        %1075 = vmatmul.bf16.gmra.mxu0 %v994
        %v1076 = vpop.f32.mrf.mxu0
        %v1077 = vadd.f32 %v947, %v1076
        %v1078 = vpop.f32.mrf.mxu0
        %v1079 = vadd.f32 %v947, %v1078
        %1080 = vmatmul.bf16.gmra.mxu0 %v996
        %v1081 = vpop.f32.mrf.mxu0
        %v1082 = vadd.f32 %v947, %v1081
        %v1083 = vpop.f32.mrf.mxu0
        %v1084 = vadd.f32 %v947, %v1083
        %1085 = vmatmul.bf16.gmra.mxu0 %v998
        %v1086 = vpop.f32.mrf.mxu0
        %v1087 = vadd.f32 %v947, %v1086
        %v1088 = vpop.f32.mrf.mxu0
        %v1089 = vadd.f32 %v947, %v1088
        %1090 = vmatmul.bf16.gmra.mxu0 %v1000
        %v1091 = vpop.f32.mrf.mxu0
        %v1092 = vadd.f32 %v947, %v1091
        %v1093 = vpop.f32.mrf.mxu0
        %v1094 = vadd.f32 %v947, %v1093
        %1095 = vdwg.mxu0
        %vm1096 = vcmp.ge.f32.partialorder %v1012, 0.0
        %vm1097 = vcmp.ge.f32.partialorder %v1014, 0.0
        %vm1098 = vcmp.ge.f32.partialorder %v1017, 0.0
        %vm1099 = vcmp.ge.f32.partialorder %v1019, 0.0
        %vm1100 = vcmp.ge.f32.partialorder %v1022, 0.0
        %vm1101 = vcmp.ge.f32.partialorder %v1024, 0.0
        %vm1102 = vcmp.ge.f32.partialorder %v1027, 0.0
        %vm1103 = vcmp.ge.f32.partialorder %v1029, 0.0
        %vm1104 = vcmp.ge.f32.partialorder %v1032, 0.0
        %vm1105 = vcmp.ge.f32.partialorder %v1034, 0.0
        %vm1106 = vcmp.ge.f32.partialorder %v1037, 0.0
        %vm1107 = vcmp.ge.f32.partialorder %v1039, 0.0
        %vm1108 = vcmp.ge.f32.partialorder %v1042, 0.0
        %vm1109 = vcmp.ge.f32.partialorder %v1044, 0.0
        %vm1110 = vcmp.ge.f32.partialorder %v1047, 0.0
        %vm1111 = vcmp.ge.f32.partialorder %v1049, 0.0
        %vm1112 = vcmp.ge.f32.partialorder %v1052, 0.0
        %vm1113 = vcmp.ge.f32.partialorder %v1054, 0.0
        %vm1114 = vcmp.ge.f32.partialorder %v1057, 0.0
        %vm1115 = vcmp.ge.f32.partialorder %v1059, 0.0
        %vm1116 = vcmp.ge.f32.partialorder %v1062, 0.0
        %vm1117 = vcmp.ge.f32.partialorder %v1064, 0.0
        %vm1118 = vcmp.ge.f32.partialorder %v1067, 0.0
        %vm1119 = vcmp.ge.f32.partialorder %v1069, 0.0
        %vm1120 = vcmp.ge.f32.partialorder %v1072, 0.0
        %vm1121 = vcmp.ge.f32.partialorder %v1074, 0.0
        %vm1122 = vcmp.ge.f32.partialorder %v1077, 0.0
        %vm1123 = vcmp.ge.f32.partialorder %v1079, 0.0
        %vm1124 = vcmp.ge.f32.partialorder %v1082, 0.0
        %vm1125 = vcmp.ge.f32.partialorder %v1084, 0.0
        %vm1126 = vcmp.ge.f32.partialorder %v1087, 0.0
        %vm1127 = vcmp.ge.f32.partialorder %v1089, 0.0
        %vm1128 = vcmp.ge.f32.partialorder %v1092, 0.0
        %vm1129 = vcmp.ge.f32.partialorder %v1094, 0.0
        %v1130 = vmul.f32 %v1012, 0.2
        %v1131 = vmul.f32 %v1014, 0.2
        %v1132 = vmul.f32 %v1017, 0.2
        %v1133 = vmul.f32 %v1019, 0.2
        %v1134 = vmul.f32 %v1022, 0.2
        %v1135 = vmul.f32 %v1024, 0.2
        %v1136 = vmul.f32 %v1027, 0.2
        %v1137 = vmul.f32 %v1029, 0.2
        %v1138 = vmul.f32 %v1032, 0.2
        %v1139 = vmul.f32 %v1034, 0.2
        %v1140 = vmul.f32 %v1037, 0.2
        %v1141 = vmul.f32 %v1039, 0.2
        %v1142 = vmul.f32 %v1042, 0.2
        %v1143 = vmul.f32 %v1044, 0.2
        %v1144 = vmul.f32 %v1047, 0.2
        %v1145 = vmul.f32 %v1049, 0.2
        %v1146 = vmul.f32 %v1052, 0.2
        %v1147 = vmul.f32 %v1054, 0.2
        %v1148 = vmul.f32 %v1057, 0.2
        %v1149 = vmul.f32 %v1059, 0.2
        %v1150 = vmul.f32 %v1062, 0.2
        %v1151 = vmul.f32 %v1064, 0.2
        %v1152 = vmul.f32 %v1067, 0.2
        %v1153 = vmul.f32 %v1069, 0.2
        %v1154 = vmul.f32 %v1072, 0.2
        %v1155 = vmul.f32 %v1074, 0.2
        %v1156 = vmul.f32 %v1077, 0.2
        %v1157 = vmul.f32 %v1079, 0.2
        %v1158 = vmul.f32 %v1082, 0.2
        %v1159 = vmul.f32 %v1084, 0.2
        %v1160 = vmul.f32 %v1087, 0.2
        %v1161 = vmul.f32 %v1089, 0.2
        %v1162 = vmul.f32 %v1092, 0.2
        %v1163 = vmul.f32 %v1094, 0.2
        %v1164 = vsel %vm1096, %v1012, %v1130
        %v1165 = vsel %vm1097, %v1014, %v1131
        %v1166 = vsel %vm1098, %v1017, %v1132
        %v1167 = vsel %vm1099, %v1019, %v1133
        %v1168 = vsel %vm1100, %v1022, %v1134
        %v1169 = vsel %vm1101, %v1024, %v1135
        %v1170 = vsel %vm1102, %v1027, %v1136
        %v1171 = vsel %vm1103, %v1029, %v1137
        %v1172 = vsel %vm1104, %v1032, %v1138
        %v1173 = vsel %vm1105, %v1034, %v1139
        %v1174 = vsel %vm1106, %v1037, %v1140
        %v1175 = vsel %vm1107, %v1039, %v1141
        %v1176 = vsel %vm1108, %v1042, %v1142
        %v1177 = vsel %vm1109, %v1044, %v1143
        %v1178 = vsel %vm1110, %v1047, %v1144
        %v1179 = vsel %vm1111, %v1049, %v1145
        %v1180 = vsel %vm1112, %v1052, %v1146
        %v1181 = vsel %vm1113, %v1054, %v1147
        %v1182 = vsel %vm1114, %v1057, %v1148
        %v1183 = vsel %vm1115, %v1059, %v1149
        %v1184 = vsel %vm1116, %v1062, %v1150
        %v1185 = vsel %vm1117, %v1064, %v1151
        %v1186 = vsel %vm1118, %v1067, %v1152
        %v1187 = vsel %vm1119, %v1069, %v1153
        %v1188 = vsel %vm1120, %v1072, %v1154
        %v1189 = vsel %vm1121, %v1074, %v1155
        %v1190 = vsel %vm1122, %v1077, %v1156
        %v1191 = vsel %vm1123, %v1079, %v1157
        %v1192 = vsel %vm1124, %v1082, %v1158
        %v1193 = vsel %vm1125, %v1084, %v1159
        %v1194 = vsel %vm1126, %v1087, %v1160
        %v1195 = vsel %vm1127, %v1089, %v1161
        %v1196 = vsel %vm1128, %v1092, %v1162
        %v1197 = vsel %vm1129, %v1094, %v1163
        %v1198 = vpack.c.bf16 %v1164, %v1164
        %v1199 = vpack.c.bf16 %v1165, %v1165
        %v1200 = vpack.c.bf16 %v1166, %v1166
        %v1201 = vpack.c.bf16 %v1167, %v1167
        %v1202 = vpack.c.bf16 %v1168, %v1168
        %v1203 = vpack.c.bf16 %v1169, %v1169
        %v1204 = vpack.c.bf16 %v1170, %v1170
        %v1205 = vpack.c.bf16 %v1171, %v1171
        %v1206 = vpack.c.bf16 %v1172, %v1172
        %v1207 = vpack.c.bf16 %v1173, %v1173
        %v1208 = vpack.c.bf16 %v1174, %v1174
        %v1209 = vpack.c.bf16 %v1175, %v1175
        %v1210 = vpack.c.bf16 %v1176, %v1176
        %v1211 = vpack.c.bf16 %v1177, %v1177
        %v1212 = vpack.c.bf16 %v1178, %v1178
        %v1213 = vpack.c.bf16 %v1179, %v1179
        %v1214 = vpack.c.bf16 %v1180, %v1180
        %v1215 = vpack.c.bf16 %v1181, %v1181
        %v1216 = vpack.c.bf16 %v1182, %v1182
        %v1217 = vpack.c.bf16 %v1183, %v1183
        %v1218 = vpack.c.bf16 %v1184, %v1184
        %v1219 = vpack.c.bf16 %v1185, %v1185
        %v1220 = vpack.c.bf16 %v1186, %v1186
        %v1221 = vpack.c.bf16 %v1187, %v1187
        %v1222 = vpack.c.bf16 %v1188, %v1188
        %v1223 = vpack.c.bf16 %v1189, %v1189
        %v1224 = vpack.c.bf16 %v1190, %v1190
        %v1225 = vpack.c.bf16 %v1191, %v1191
        %v1226 = vpack.c.bf16 %v1192, %v1192
        %v1227 = vpack.c.bf16 %v1193, %v1193
        %v1228 = vpack.c.bf16 %v1194, %v1194
        %v1229 = vpack.c.bf16 %v1195, %v1195
        %v1230 = vpack.c.bf16 %v1196, %v1196
        %v1231 = vpack.c.bf16 %v1197, %v1197
        %1232 = vst [vmem:[%s294] sm:$0xf] %v1198
        %1233 = vst [vmem:[%s294 + $0x4] sm:$0xf] %v1199
        %1234 = vst [vmem:[%s294 + $0x8] sm:$0xf] %v1200
        %1235 = vst [vmem:[%s294 + $0xc] sm:$0xf] %v1201
        %1236 = vst [vmem:[%s294 + $0x10] sm:$0xf] %v1202
        %1237 = vst [vmem:[%s294 + $0x14] sm:$0xf] %v1203
        %1238 = vst [vmem:[%s294 + $0x18] sm:$0xf] %v1204
        %1239 = vst [vmem:[%s294 + $0x1c] sm:$0xf] %v1205
        %1240 = vst [vmem:[%s294 + $0x20] sm:$0xf] %v1206
        %1241 = vst [vmem:[%s294 + $0x24] sm:$0xf] %v1207
        %1242 = vst [vmem:[%s294 + $0x28] sm:$0xf] %v1208
        %1243 = vst [vmem:[%s294 + $0x2c] sm:$0xf] %v1209
        %1244 = vst [vmem:[%s294 + $0x30] sm:$0xf] %v1210
        %1245 = vst [vmem:[%s294 + $0x34] sm:$0xf] %v1211
        %1246 = vst [vmem:[%s294 + $0x38] sm:$0xf] %v1212
        %1247 = vst [vmem:[%s294 + $0x3c] sm:$0xf] %v1213
        %1248 = vst [vmem:[%s294 + $0x40] sm:$0xf] %v1214
        %1249 = vst [vmem:[%s294 + $0x44] sm:$0xf] %v1215
        %1250 = vst [vmem:[%s294 + $0x48] sm:$0xf] %v1216
        %1251 = vst [vmem:[%s294 + $0x4c] sm:$0xf] %v1217
        %1252 = vst [vmem:[%s294 + $0x50] sm:$0xf] %v1218
        %1253 = vst [vmem:[%s294 + $0x54] sm:$0xf] %v1219
        %1254 = vst [vmem:[%s294 + $0x58] sm:$0xf] %v1220
        %1255 = vst [vmem:[%s294 + $0x5c] sm:$0xf] %v1221
        %1256 = vst [vmem:[%s294 + $0x60] sm:$0xf] %v1222
        %1257 = vst [vmem:[%s294 + $0x64] sm:$0xf] %v1223
        %1258 = vst [vmem:[%s294 + $0x68] sm:$0xf] %v1224
        %1259 = vst [vmem:[%s294 + $0x6c] sm:$0xf] %v1225
        %1260 = vst [vmem:[%s294 + $0x70] sm:$0xf] %v1226
        %1261 = vst [vmem:[%s294 + $0x74] sm:$0xf] %v1227
        %1262 = vst [vmem:[%s294 + $0x78] sm:$0xf] %v1228
        %1263 = vst [vmem:[%s294 + $0x7c] sm:$0xf] %v1229
        %1264 = vst [vmem:[%s294 + $0x80] sm:$0xf] %v1230
        %1265 = vst [vmem:[%s294 + $0x84] sm:$0xf] %v1231
        %s1266 = sand.u32 %s182, 1
        %s1267 = scalar_lea.sflag [#allocation4], %s1266
        %s1268 = sand.u32 %s182, 1
        %s1269 = smul.addr %s1268, 136
        %s1270 = scalar_lea.vmem [#allocation3], %s1269
        // Predicated region
        $region45: #{tpu_custom_call.1} parent=43 // pred_check
          %p1271 = pneg %p192
        $region46: #{tpu_custom_call.1} parent=43 // pred_check_branch
          %1273 = sbr.rel (%p1271) target = $region48
        $region47: #{tpu_custom_call.1} parent=43 // pred_region
          %1275 = vsyncadd %s1267, 0
          %s1276 = smul.addr %s25, 34
          %s1277 = smul.addr %s24, 34
          %s1278 = sadd.s32 %s1276, %s1277
          %s1279 = smul.addr %s1278, 4
          %s1280 = scalar_lea.hbm %s6, %s1279
          %s1281 = sshll.u32 %s1270, 4
          %s1282 = int_to_ptr.vmem [resolvable:$true] %s1281
          %s1283 = sshll.u32 %s1280, 4
          %s1284 = int_to_ptr.hbm [resolvable:$true] %s1283
          %1289 = dma.vmem_to_hbm [thread:$0]  %s1282, 2176, %s1284, %s1267, 64, 64, 4
        $region48: #{tpu_custom_call.1} parent=43 // pred_fallthru
          _
      $region44: #{tpu_custom_call.1} parent=5 // pred_fallthru
        _
      %p1290 = scmp.le.s32.totalorder 2, %s15
      // Predicated region
      $region49: #{tpu_custom_call.1} parent=5 // pred_check
        %p1291 = pneg %p1290
      $region50: #{tpu_custom_call.1} parent=5 // pred_check_branch
        %1293 = sbr.rel (%p1291) target = $region52
      $region51: #{tpu_custom_call.1} parent=5 // pred_region
        %s1294 = ssub.s32 %s15, 2
        // Predicated region
        $region53: #{tpu_custom_call.1} parent=51 // pred_check
          %p1295 = pneg %p198
        $region54: #{tpu_custom_call.1} parent=51 // pred_check_branch
          %1297 = sbr.rel (%p1295) target = $region56
        $region55: #{tpu_custom_call.1} parent=51 // pred_region
          %s1298 = sand.u32 %s183, 1
          %s1299 = scalar_lea.sflag [#allocation4], %s1298
          %s1300 = sand.u32 %s183, 1
          %s1301 = smul.addr %s1300, 136
          %s1302 = scalar_lea.vmem [#allocation3], %s1301
          %1304 = dma.done %s1299, 2176
        $region56: #{tpu_custom_call.1} parent=51 // pred_fallthru
          _
      $region52: #{tpu_custom_call.1} parent=5 // pred_fallthru
        _
    $region6: #{tpu_custom_call.1} parent=1 // loop_footer
      %s19 = sadd.s32 1, %s15
    $region7: #{tpu_custom_call.1} parent=1 // loop_footer_branch
      %14 = sbr.rel target = $region3
    $region8: #{tpu_custom_call.1} parent=1 // loop_exit
      _
    %1305 = vsyncpa [#allocation4], 1
    %s1306 = scalar_lea.sflag [#allocation4], 1
    %1307 = vsyncpa %s1306, 1

</llo_original>
